<compile_context>
chip_gen: v5e
topology: v5e:2x2
jax: 0.10.0
libtpu: 0.0.40
codegen_flags: <defaults>
</compile_context>

<pallas_src>
import math
from functools import partial

import numpy as np
import jax
import jax.numpy as jnp
from jax.experimental import pallas as pl
from jax.experimental.pallas import tpu as pltpu


# ---------------------------------------------------------------------------
# Fused Pallas kernel: conv1(s2)+relu -> conv2+relu -> conv3+relu
# ---------------------------------------------------------------------------
def _fused_cnn_kernel(x1_ref, w1_ref, b1_ref, w2_ref, b2_ref, w3_ref, b3_ref,
                      out_ref, *, chunk_rows, n_chunks):
    """Per grid step (one batch block of block_b images, 16 slab rows each):
       x1_ref : (block_b*16, 128) bf16  conv1 row-im2col (90 lanes used)
       w1_ref : (128, 256)        bf16  banded conv1 weights
       b1_ref : (1, 256)          f32
       w2_ref : (3, 256, 256)     bf16  banded conv2 weights (one per dy)
       b2_ref : (1, 256)          f32
       w3_ref : (3, 256, 256)     bf16  banded conv3 weights (10 ch padded to 16)
       b3_ref : (1, 256)          f32
       out_ref: (block_b*16, 256) f32   lane-dense output slab
    """
    C = chunk_rows

    # Row mask: per-image slab rows 1..14 are real; rows 0/15 are the vertical
    # padding of the next conv and must be exactly zero.
    rk = jax.lax.broadcasted_iota(jnp.int32, (C, 1), 0) % 16
    rowmask = jnp.logical_and(rk >= 1, rk <= 14).astype(jnp.float32)

    zrow = jnp.zeros((1, 256), jnp.float32)

    # Hoist loop-invariant weight/bias loads out of the chunk loop.
    w1 = w1_ref[...]
    b1 = b1_ref[...]
    b2 = b2_ref[...]
    b3 = b3_ref[...]
    w2_taps = (w2_ref[0], w2_ref[1], w2_ref[2])
    w3_taps = (w3_ref[0], w3_ref[1], w3_ref[2])

    def banded_conv(h, taps, bias):
        # h: (C,256) bf16.  taps[dy]: (256,256) bf16.  Vertical taps via two
        # aligned full-slab row shifts:  out[r] = z0[r-1] + z1[r] + z2[r+1].
        z0 = jnp.dot(h, taps[0], preferred_element_type=jnp.float32)
        z1 = jnp.dot(h, taps[1], preferred_element_type=jnp.float32)
        z2 = jnp.dot(h, taps[2], preferred_element_type=jnp.float32)
        z0s = jnp.concatenate([zrow, z0[:C - 1, :]], axis=0)   # -> z0[r-1]
        z2s = jnp.concatenate([z2[1:, :], zrow], axis=0)       # -> z2[r+1]
        return jnp.maximum(z0s + z1 + z2s + bias, 0.0)

    # Unrolled chunk loop; chunks are whole images, so they are independent and
    # every matmul temporary's live range is bounded by the chunk store.
    for c in range(n_chunks):
        r0 = c * C                                             # static, 8-aligned
        x1 = x1_ref[r0:r0 + C, :]                              # (C,128) bf16
        y1 = jnp.dot(x1, w1, preferred_element_type=jnp.float32)
        h1 = (jnp.maximum(y1 + b1, 0.0) * rowmask).astype(jnp.bfloat16)
        h2 = (banded_conv(h1, w2_taps, b2) * rowmask).astype(jnp.bfloat16)
        out_ref[r0:r0 + C, :] = banded_conv(h2, w3_taps, b3)   # aligned store


# ---------------------------------------------------------------------------
# One-time parameter repacking (banded bf16 weight matrices + tiled f32 biases)
# ---------------------------------------------------------------------------
def pack_params(params):
    (w1, b1), (w2, b2), (w3, b3) = params
    w1 = np.asarray(w1, np.float32)
    w2 = np.asarray(w2, np.float32)
    w3 = np.asarray(w3, np.float32)

    # conv1 (3x3, stride 2): row = dy*30 + padded_col (K, lanes 90..127 zero),
    # col = ox*16 + cout (lanes 224..255 zero).
    W1 = np.zeros((128, 256), np.float32)
    for dy in range(3):
        for ox in range(14):
            for dx in range(3):
                xc = 2 * ox + dx
                W1[dy * 30 + xc, ox * 16:ox * 16 + 16] = w1[:, 0, dy, dx]

    # conv2/conv3 (3x3, stride 1): per-dy banded matrices.  Row = xin*16 + cin
    # with xin = ox + dx - 1 (out-of-range taps skipped -> activations live at
    # lane offset 0, pad lanes at the end stay zero-weighted).
    def band_stride1(w):
        cout, cin = w.shape[0], w.shape[1]
        W = np.zeros((3, 256, 256), np.float32)
        for dy in range(3):
            for ox in range(14):
                for dx in range(3):
                    xin = ox + dx - 1
                    if 0 <= xin < 14:
                        W[dy, xin * 16:xin * 16 + cin,
                          ox * 16:ox * 16 + cout] = w[:, :, dy, dx].T
        return W

    W2 = band_stride1(w2)                          # (3, 256, 256)
    W3 = band_stride1(w3)                          # (3, 256, 256), 10 real ch

    def tile_bias(b, cout):
        bt = np.zeros((1, 256), np.float32)
        bv = np.asarray(b, np.float32)
        for ox in range(14):
            bt[0, ox * 16:ox * 16 + cout] = bv
        return bt

    b1t = tile_bias(b1, 16)
    b2t = tile_bias(b2, 16)
    b3t = tile_bias(b3, 10)

    return (jnp.asarray(W1, jnp.bfloat16), jnp.asarray(b1t),
            jnp.asarray(W2, jnp.bfloat16), jnp.asarray(b2t),
            jnp.asarray(W3, jnp.bfloat16), jnp.asarray(b3t))


# ---------------------------------------------------------------------------
# Block-size heuristic (>=2 grid blocks when possible, multiples of 8 images)
# ---------------------------------------------------------------------------
def _pick_block_b(n, block_b):
    if n <= 8:
        return max(1, (n + 1) // 2)
    bb = min(block_b, 8 * pl.cdiv(n, 16))
    return max(8, (bb // 8) * 8)


# ---------------------------------------------------------------------------
# Forward pass (wrapper)
# ---------------------------------------------------------------------------
def mnist_cnn_forward(x, packed_params, block_b=32):
    w1b, b1t, w2b, b2t, w3b, b3t = packed_params

    xb = x.reshape(-1, 28, 28).astype(jnp.float32)       # PyTorch .view(-1,1,28,28)
    n = xb.shape[0]

    bb = _pick_block_b(n, block_b)
    n_pad = pl.cdiv(n, bb) * bb
    if n_pad != n:
        xb = jnp.concatenate(
            [xb, jnp.zeros((n_pad - n, 28, 28), jnp.float32)], axis=0)

    # conv1 row-im2col with the two vertical pad rows interleaved per image:
    # slab row k: k=0/15 -> zero pad rows, k=1..14 -> conv1 output row oy=k-1
    # needing padded input rows 2oy, 2oy+1, 2oy+2 (30 px each -> 90 lanes,
    # zero-padded to 128).
    xp = jnp.pad(xb, ((0, 0), (1, 1), (1, 1)))                                # (n_pad,30,30)
    rows = jnp.concatenate(
        [xp[:, 0:28:2, :], xp[:, 1:29:2, :], xp[:, 2:30:2, :]], axis=-1)      # (n_pad,14,90)
    rows = jnp.pad(rows, ((0, 0), (1, 1), (0, 128 - 90)))                     # (n_pad,16,128)
    x1 = rows.reshape(n_pad * 16, 128).astype(jnp.bfloat16)

    chunk_imgs = min(8, bb)
    n_chunks = bb // chunk_imgs
    bm = bb * 16

    kern = partial(_fused_cnn_kernel,
                   chunk_rows=chunk_imgs * 16, n_chunks=n_chunks)
    out = pl.pallas_call(
        kern,
        out_shape=jax.ShapeDtypeStruct((n_pad * 16, 256), jnp.float32),
        grid=(n_pad // bb,),
        in_specs=[
            pl.BlockSpec((bm, 128), lambda i: (i, 0)),          # x1 (per block)
            pl.BlockSpec((128, 256), lambda i: (0, 0)),         # W1 (resident)
            pl.BlockSpec((1, 256), lambda i: (0, 0)),           # b1
            pl.BlockSpec((3, 256, 256), lambda i: (0, 0, 0)),   # W2 (resident)
            pl.BlockSpec((1, 256), lambda i: (0, 0)),           # b2
            pl.BlockSpec((3, 256, 256), lambda i: (0, 0, 0)),   # W3 (resident)
            pl.BlockSpec((1, 256), lambda i: (0, 0)),           # b3
        ],
        out_specs=pl.BlockSpec((bm, 256), lambda i: (i, 0)),
        compiler_params=pltpu.CompilerParams(
            dimension_semantics=("parallel",)),
    )(x1, w1b, b1t, w2b, b2t, w3b, b3t)

    # (n_pad*16,256) -> (img, slab row, column slot, channel); keep real rows
    # 1..14, columns 0..13, channels 0..9; NCHW like PyTorch.
    out = out.reshape(n_pad, 16, 16, 16)[:n, 1:15, :14, :10]
    return jnp.transpose(out, (0, 3, 1, 2))


# ---------------------------------------------------------------------------
# Parameter init (deterministic, PyTorch-default-style uniform init)
# ---------------------------------------------------------------------------
def init_params(key):
    def conv_init(kw_, kb_, cout, cin, k):
        bound = 1.0 / math.sqrt(cin * k * k)
        w = jax.random.uniform(kw_, (cout, cin, k, k), jnp.float32, -bound, bound)
        b = jax.random.uniform(kb_, (cout,), jnp.float32, -bound, bound)
        return w, b

    ks = jax.random.split(key, 6)
    w1, b1 = conv_init(ks[0], ks[1], 16, 1, 3)    # conv1: 1 -> 16, k3, s2, p1
    w2, b2 = conv_init(ks[2], ks[3], 16, 16, 3)   # conv2: 16 -> 16, k3, s1, p1
    w3, b3 = conv_init(ks[4], ks[5], 10, 16, 3)   # conv3: 16 -> 10, k3, s1, p1
    return (w1, b1), (w2, b2), (w3, b3)


# ---------------------------------------------------------------------------
# Pure-JAX references (f32 exact, and bf16-faithful to the kernel's precision)
# ---------------------------------------------------------------------------
def reference_forward(x, params, bf16_storage=False):
    (w1, b1), (w2, b2), (w3, b3) = params

    def q(a):
        return a.astype(jnp.bfloat16).astype(jnp.float32) if bf16_storage else a

    def conv(h, w, b, stride):
        y = jax.lax.conv_general_dilated(
            h, q(w), (stride, stride), ((1, 1), (1, 1)),
            dimension_numbers=("NCHW", "OIHW", "NCHW"),
            precision=jax.lax.Precision.HIGHEST)
        return jax.nn.relu(y + b[None, :, None, None])

    h = q(x.reshape(-1, 1, 28, 28).astype(jnp.float32))
    h = q(conv(h, w1, b1, 2))
    h = q(conv(h, w2, b2, 1))
    return conv(h, w3, b3, 1)


if __name__ == "__main__":
    key = jax.random.PRNGKey(0)
    kp, kx = jax.random.split(key)
    params = init_params(kp)
    packed = pack_params(params)          # one-time weight repack (hoisted)

    # batch=2 flattened MNIST-shaped input (the module views it to (-1,1,28,28))
    x = jax.random.normal(kx, (2, 784), jnp.float32)

    out = jax.block_until_ready(mnist_cnn_forward(x, packed))
    assert out.shape == (2, 10, 14, 14), out.shape

    # Tight check vs a reference with the same bf16 quantization points as the
    # kernel (f32 accumulation): should agree to accumulation-order noise.
    ref_b = jax.block_until_ready(reference_forward(x, params, bf16_storage=True))
    err_b = float(jnp.max(jnp.abs(out - ref_b)))
    assert jnp.allclose(out, ref_b, atol=5e-3, rtol=5e-3), f"bf16-ref max err={err_b}"

    # Loose check vs the exact f32 convolution reference (bf16 storage error).
    ref_f = jax.block_until_ready(reference_forward(x, params, bf16_storage=False))
    err_f = float(jnp.max(jnp.abs(out - ref_f)))
    assert jnp.allclose(out, ref_f, atol=5e-2, rtol=5e-2), f"f32-ref max err={err_f}"

    print("KERNEL_OK")
</pallas_src>

<mosaic_0001>
module attributes {stable_mosaic.version = 11 : i64} {
  func.func @_fused_cnn_kernel(%arg0: i32, %arg1: memref<16x128xbf16, #tpu.memory_space<vmem>>, %arg2: memref<128x256xbf16, #tpu.memory_space<vmem>>, %arg3: memref<1x256xf32, #tpu.memory_space<vmem>>, %arg4: memref<3x256x256xbf16, #tpu.memory_space<vmem>>, %arg5: memref<1x256xf32, #tpu.memory_space<vmem>>, %arg6: memref<3x256x256xbf16, #tpu.memory_space<vmem>>, %arg7: memref<1x256xf32, #tpu.memory_space<vmem>>, %arg8: memref<16x256xf32, #tpu.memory_space<vmem>>) attributes {dimension_semantics = [#tpu.dimension_semantics<parallel>], iteration_bounds = array<i64: 2>, scalar_prefetch = 0 : i64, scratch_operands = 0 : i64, tpu.core_type = #tpu.core_type<tc>, window_params = [{transform_indices = @transform_0, window_bounds = array<i64: 16, 128>}, {pipeline_mode = #tpu.pipeline_mode<synchronous>, transform_indices = @transform_1, window_bounds = array<i64: 128, 256>}, {pipeline_mode = #tpu.pipeline_mode<synchronous>, transform_indices = @transform_2, window_bounds = array<i64: 1, 256>}, {pipeline_mode = #tpu.pipeline_mode<synchronous>, transform_indices = @transform_3, window_bounds = array<i64: 3, 256, 256>}, {pipeline_mode = #tpu.pipeline_mode<synchronous>, transform_indices = @transform_4, window_bounds = array<i64: 1, 256>}, {pipeline_mode = #tpu.pipeline_mode<synchronous>, transform_indices = @transform_5, window_bounds = array<i64: 3, 256, 256>}, {pipeline_mode = #tpu.pipeline_mode<synchronous>, transform_indices = @transform_6, window_bounds = array<i64: 1, 256>}, {transform_indices = @transform_7, window_bounds = array<i64: 16, 256>}]} {
    %0 = tpu.iota {dimensions = array<i32: 0>} : vector<16x1xi32>
    %c16_i32 = arith.constant 16 : i32
    %c0_i32 = arith.constant 0 : i32
    %1 = arith.cmpi eq, %c16_i32, %c0_i32 : i32
    %c1_i32 = arith.constant 1 : i32
    %2 = arith.select %1, %c1_i32, %c16_i32 : i32
    %3 = vector.broadcast %2 : i32 to vector<16x1xi32>
    %4 = arith.remsi %0, %3 : vector<16x1xi32>
    %c0_i32_0 = arith.constant 0 : i32
    %5 = vector.broadcast %c0_i32_0 : i32 to vector<16x1xi32>
    %6 = arith.cmpi ne, %4, %5 : vector<16x1xi32>
    %c0_i32_1 = arith.constant 0 : i32
    %7 = vector.broadcast %c0_i32_1 : i32 to vector<16x1xi32>
    %8 = arith.cmpi slt, %4, %7 : vector<16x1xi32>
    %c0_i32_2 = arith.constant 0 : i32
    %9 = arith.cmpi slt, %2, %c0_i32_2 : i32
    %10 = vector.broadcast %9 : i1 to vector<16x1xi1>
    %11 = vector.broadcast %10 : vector<16x1xi1> to vector<16x1xi1>
    %12 = arith.xori %8, %11 : vector<16x1xi1>
    %13 = arith.andi %12, %6 : vector<16x1xi1>
    %14 = vector.broadcast %2 : i32 to vector<16x1xi32>
    %15 = arith.addi %4, %14 : vector<16x1xi32>
    %16 = arith.select %13, %15, %4 : vector<16x1xi1>, vector<16x1xi32>
    %c1_i32_3 = arith.constant 1 : i32
    %17 = vector.broadcast %c1_i32_3 : i32 to vector<16x1xi32>
    %18 = arith.cmpi sge, %16, %17 : vector<16x1xi32>
    %c14_i32 = arith.constant 14 : i32
    %19 = vector.broadcast %c14_i32 : i32 to vector<16x1xi32>
    %20 = arith.cmpi sle, %16, %19 : vector<16x1xi32>
    %21 = arith.andi %18, %20 : vector<16x1xi1>
    %22 = arith.extui %21 : vector<16x1xi1> to vector<16x1xi32>
    %23 = arith.sitofp %22 : vector<16x1xi32> to vector<16x1xf32>
    %cst = arith.constant 0.000000e+00 : f32
    %24 = vector.broadcast %cst : f32 to vector<1x256xf32>
    %c0 = arith.constant 0 : index
    %c0_4 = arith.constant 0 : index
    %25 = vector.load %arg2[%c0, %c0_4] : memref<128x256xbf16, #tpu.memory_space<vmem>>, vector<128x256xbf16>
    %c0_5 = arith.constant 0 : index
    %c0_6 = arith.constant 0 : index
    %26 = vector.load %arg3[%c0_5, %c0_6] : memref<1x256xf32, #tpu.memory_space<vmem>>, vector<1x256xf32>
    %c0_7 = arith.constant 0 : index
    %c0_8 = arith.constant 0 : index
    %27 = vector.load %arg5[%c0_7, %c0_8] : memref<1x256xf32, #tpu.memory_space<vmem>>, vector<1x256xf32>
    %c0_9 = arith.constant 0 : index
    %c0_10 = arith.constant 0 : index
    %28 = vector.load %arg7[%c0_9, %c0_10] : memref<1x256xf32, #tpu.memory_space<vmem>>, vector<1x256xf32>
    %c0_11 = arith.constant 0 : index
    %c0_12 = arith.constant 0 : index
    %c0_13 = arith.constant 0 : index
    %29 = vector.load %arg4[%c0_11, %c0_12, %c0_13] : memref<3x256x256xbf16, #tpu.memory_space<vmem>>, vector<1x256x256xbf16>
    %30 = vector.shape_cast %29 : vector<1x256x256xbf16> to vector<256x256xbf16>
    %c1 = arith.constant 1 : index
    %c0_14 = arith.constant 0 : index
    %c0_15 = arith.constant 0 : index
    %31 = vector.load %arg4[%c1, %c0_14, %c0_15] : memref<3x256x256xbf16, #tpu.memory_space<vmem>>, vector<1x256x256xbf16>
    %32 = vector.shape_cast %31 : vector<1x256x256xbf16> to vector<256x256xbf16>
    %c2 = arith.constant 2 : index
    %c0_16 = arith.constant 0 : index
    %c0_17 = arith.constant 0 : index
    %33 = vector.load %arg4[%c2, %c0_16, %c0_17] : memref<3x256x256xbf16, #tpu.memory_space<vmem>>, vector<1x256x256xbf16>
    %34 = vector.shape_cast %33 : vector<1x256x256xbf16> to vector<256x256xbf16>
    %c0_18 = arith.constant 0 : index
    %c0_19 = arith.constant 0 : index
    %c0_20 = arith.constant 0 : index
    %35 = vector.load %arg6[%c0_18, %c0_19, %c0_20] : memref<3x256x256xbf16, #tpu.memory_space<vmem>>, vector<1x256x256xbf16>
    %36 = vector.shape_cast %35 : vector<1x256x256xbf16> to vector<256x256xbf16>
    %c1_21 = arith.constant 1 : index
    %c0_22 = arith.constant 0 : index
    %c0_23 = arith.constant 0 : index
    %37 = vector.load %arg6[%c1_21, %c0_22, %c0_23] : memref<3x256x256xbf16, #tpu.memory_space<vmem>>, vector<1x256x256xbf16>
    %38 = vector.shape_cast %37 : vector<1x256x256xbf16> to vector<256x256xbf16>
    %c2_24 = arith.constant 2 : index
    %c0_25 = arith.constant 0 : index
    %c0_26 = arith.constant 0 : index
    %39 = vector.load %arg6[%c2_24, %c0_25, %c0_26] : memref<3x256x256xbf16, #tpu.memory_space<vmem>>, vector<1x256x256xbf16>
    %40 = vector.shape_cast %39 : vector<1x256x256xbf16> to vector<256x256xbf16>
    %c0_27 = arith.constant 0 : index
    %c0_28 = arith.constant 0 : index
    %41 = vector.load %arg1[%c0_27, %c0_28] : memref<16x128xbf16, #tpu.memory_space<vmem>>, vector<16x128xbf16>
    %cst_29 = arith.constant dense<0.000000e+00> : vector<16x256xf32>
    %42 = tpu.matmul %41, %25, %cst_29 {dimension_numbers = #tpu.dot_dimension_numbers<[1], [0], [0], [1], [0, 0, 1, 1], [], []>} : vector<16x128xbf16>, vector<128x256xbf16>, vector<16x256xf32> -> vector<16x256xf32>
    %43 = vector.broadcast %26 : vector<1x256xf32> to vector<16x256xf32>
    %44 = arith.addf %42, %43 : vector<16x256xf32>
    %cst_30 = arith.constant 0.000000e+00 : f32
    %45 = vector.broadcast %cst_30 : f32 to vector<16x256xf32>
    %46 = arith.maximumf %44, %45 : vector<16x256xf32>
    %47 = vector.broadcast %23 : vector<16x1xf32> to vector<16x256xf32>
    %48 = arith.mulf %46, %47 : vector<16x256xf32>
    %49 = arith.truncf %48 : vector<16x256xf32> to vector<16x256xbf16>
    %cst_31 = arith.constant dense<0.000000e+00> : vector<16x256xf32>
    %50 = tpu.matmul %49, %30, %cst_31 {dimension_numbers = #tpu.dot_dimension_numbers<[1], [0], [0], [1], [0, 0, 1, 1], [], []>} : vector<16x256xbf16>, vector<256x256xbf16>, vector<16x256xf32> -> vector<16x256xf32>
    %cst_32 = arith.constant dense<0.000000e+00> : vector<16x256xf32>
    %51 = tpu.matmul %49, %32, %cst_32 {dimension_numbers = #tpu.dot_dimension_numbers<[1], [0], [0], [1], [0, 0, 1, 1], [], []>} : vector<16x256xbf16>, vector<256x256xbf16>, vector<16x256xf32> -> vector<16x256xf32>
    %cst_33 = arith.constant dense<0.000000e+00> : vector<16x256xf32>
    %52 = tpu.matmul %49, %34, %cst_33 {dimension_numbers = #tpu.dot_dimension_numbers<[1], [0], [0], [1], [0, 0, 1, 1], [], []>} : vector<16x256xbf16>, vector<256x256xbf16>, vector<16x256xf32> -> vector<16x256xf32>
    %53 = vector.extract_strided_slice %50 {offsets = [0, 0], sizes = [15, 256], strides = [1, 1]} : vector<16x256xf32> to vector<15x256xf32>
    %54 = tpu.concatenate %24, %53 in 0 : vector<1x256xf32>, vector<15x256xf32> -> vector<16x256xf32>
    %55 = vector.extract_strided_slice %52 {offsets = [1, 0], sizes = [15, 256], strides = [1, 1]} : vector<16x256xf32> to vector<15x256xf32>
    %56 = tpu.concatenate %55, %24 in 0 : vector<15x256xf32>, vector<1x256xf32> -> vector<16x256xf32>
    %57 = arith.addf %54, %51 : vector<16x256xf32>
    %58 = arith.addf %57, %56 : vector<16x256xf32>
    %59 = vector.broadcast %27 : vector<1x256xf32> to vector<16x256xf32>
    %60 = arith.addf %58, %59 : vector<16x256xf32>
    %cst_34 = arith.constant 0.000000e+00 : f32
    %61 = vector.broadcast %cst_34 : f32 to vector<16x256xf32>
    %62 = arith.maximumf %60, %61 : vector<16x256xf32>
    %63 = vector.broadcast %23 : vector<16x1xf32> to vector<16x256xf32>
    %64 = arith.mulf %62, %63 : vector<16x256xf32>
    %65 = arith.truncf %64 : vector<16x256xf32> to vector<16x256xbf16>
    %cst_35 = arith.constant dense<0.000000e+00> : vector<16x256xf32>
    %66 = tpu.matmul %65, %36, %cst_35 {dimension_numbers = #tpu.dot_dimension_numbers<[1], [0], [0], [1], [0, 0, 1, 1], [], []>} : vector<16x256xbf16>, vector<256x256xbf16>, vector<16x256xf32> -> vector<16x256xf32>
    %cst_36 = arith.constant dense<0.000000e+00> : vector<16x256xf32>
    %67 = tpu.matmul %65, %38, %cst_36 {dimension_numbers = #tpu.dot_dimension_numbers<[1], [0], [0], [1], [0, 0, 1, 1], [], []>} : vector<16x256xbf16>, vector<256x256xbf16>, vector<16x256xf32> -> vector<16x256xf32>
    %cst_37 = arith.constant dense<0.000000e+00> : vector<16x256xf32>
    %68 = tpu.matmul %65, %40, %cst_37 {dimension_numbers = #tpu.dot_dimension_numbers<[1], [0], [0], [1], [0, 0, 1, 1], [], []>} : vector<16x256xbf16>, vector<256x256xbf16>, vector<16x256xf32> -> vector<16x256xf32>
    %69 = vector.extract_strided_slice %66 {offsets = [0, 0], sizes = [15, 256], strides = [1, 1]} : vector<16x256xf32> to vector<15x256xf32>
    %70 = tpu.concatenate %24, %69 in 0 : vector<1x256xf32>, vector<15x256xf32> -> vector<16x256xf32>
    %71 = vector.extract_strided_slice %68 {offsets = [1, 0], sizes = [15, 256], strides = [1, 1]} : vector<16x256xf32> to vector<15x256xf32>
    %72 = tpu.concatenate %71, %24 in 0 : vector<15x256xf32>, vector<1x256xf32> -> vector<16x256xf32>
    %73 = arith.addf %70, %67 : vector<16x256xf32>
    %74 = arith.addf %73, %72 : vector<16x256xf32>
    %75 = vector.broadcast %28 : vector<1x256xf32> to vector<16x256xf32>
    %76 = arith.addf %74, %75 : vector<16x256xf32>
    %cst_38 = arith.constant 0.000000e+00 : f32
    %77 = vector.broadcast %cst_38 : f32 to vector<16x256xf32>
    %78 = arith.maximumf %76, %77 : vector<16x256xf32>
    %c0_39 = arith.constant 0 : index
    %c0_40 = arith.constant 0 : index
    %79 = vector.load %arg8[%c0_39, %c0_40] : memref<16x256xf32, #tpu.memory_space<vmem>>, vector<16x256xf32>
    tpu.vector_store %arg8[%c0_39, %c0_40], %78 {strides = array<i32>} : memref<16x256xf32, #tpu.memory_space<vmem>>, vector<16x256xf32>,
    return
  }
  func.func @transform_0(%arg0: i32) -> (i32, i32) {
    %c0_i32 = arith.constant 0 : i32
    %c0_i32_0 = arith.constant 0 : i32
    return %arg0, %c0_i32 : i32, i32
  }
  func.func @transform_1(%arg0: i32) -> (i32, i32) {
    %c0_i32 = arith.constant 0 : i32
    %c0_i32_0 = arith.constant 0 : i32
    %c0_i32_1 = arith.constant 0 : i32
    return %c0_i32, %c0_i32_0 : i32, i32
  }
  func.func @transform_2(%arg0: i32) -> (i32, i32) {
    %c0_i32 = arith.constant 0 : i32
    %c0_i32_0 = arith.constant 0 : i32
    %c0_i32_1 = arith.constant 0 : i32
    return %c0_i32, %c0_i32_0 : i32, i32
  }
  func.func @transform_3(%arg0: i32) -> (i32, i32, i32) {
    %c0_i32 = arith.constant 0 : i32
    %c0_i32_0 = arith.constant 0 : i32
    %c0_i32_1 = arith.constant 0 : i32
    %c0_i32_2 = arith.constant 0 : i32
    return %c0_i32, %c0_i32_0, %c0_i32_1 : i32, i32, i32
  }
  func.func @transform_4(%arg0: i32) -> (i32, i32) {
    %c0_i32 = arith.constant 0 : i32
    %c0_i32_0 = arith.constant 0 : i32
    %c0_i32_1 = arith.constant 0 : i32
    return %c0_i32, %c0_i32_0 : i32, i32
  }
  func.func @transform_5(%arg0: i32) -> (i32, i32, i32) {
    %c0_i32 = arith.constant 0 : i32
    %c0_i32_0 = arith.constant 0 : i32
    %c0_i32_1 = arith.constant 0 : i32
    %c0_i32_2 = arith.constant 0 : i32
    return %c0_i32, %c0_i32_0, %c0_i32_1 : i32, i32, i32
  }
  func.func @transform_6(%arg0: i32) -> (i32, i32) {
    %c0_i32 = arith.constant 0 : i32
    %c0_i32_0 = arith.constant 0 : i32
    %c0_i32_1 = arith.constant 0 : i32
    return %c0_i32, %c0_i32_0 : i32, i32
  }
  func.func @transform_7(%arg0: i32) -> (i32, i32) {
    %c0_i32 = arith.constant 0 : i32
    %c0_i32_0 = arith.constant 0 : i32
    return %arg0, %c0_i32 : i32, i32
  }
}

</mosaic_0001>

<llo_original>
// kernel: tpu_custom_call.1
$region0: #{tpu_custom_call.1}
  #allocation0 [shape = 'u32[]', space=smem, size = 0x4, offset = 0x4, fixed_abs, tag = 'smem constant byte address 0x4 - core index']
  #allocation1 [shape = 'u32[72,128]{1,0:T(1,128)}', space=vmem, size = 0x9000, scoped, tag = 'internal scratch']
  %s0 = inlined_call_operand.hbm [shape: bf16[32,128], index: 0, kind: input, shape index: {}]
  %s1 = inlined_call_operand.hbm [shape: bf16[128,256], index: 1, kind: input, shape index: {}]
  %s2 = inlined_call_operand.hbm [shape: f32[1,256], index: 2, kind: input, shape index: {}]
  %s3 = inlined_call_operand.hbm [shape: bf16[3,256,256], index: 3, kind: input, shape index: {}]
  %s4 = inlined_call_operand.vmem [shape: f32[1,256], index: 4, kind: input, shape index: {}]
  %s5 = inlined_call_operand.hbm [shape: bf16[3,256,256], index: 5, kind: input, shape index: {}]
  %s6 = inlined_call_operand.vmem [shape: f32[1,256], index: 6, kind: input, shape index: {}]
  %s7 = inlined_call_operand.hbm [shape: f32[32,256], index: 7, kind: output, shape index: {}]
  %s8 = sld [smem:[#allocation0]]
  $region81: #{tpu_custom_call.1} parent=0
    _
  %s10 = ssub.s32 1, %s8
  %s11 = scalar_select 0, %s10, %s8
  $region1: #{tpu_custom_call.1} parent=0
    #allocation2 [shape = 'u8[8192]{0}', space=vmem, size = 0x2000, scoped, tag = 'input window, operand 0']
    #allocation3 [shape = 's32[2]{0}', space=sflag, size = 0x8, scoped, tag = 'scoped memory for tpu_custom_call.1']
    #allocation4 [shape = 's32[2]{0}', space=sflag, size = 0x8, scoped, tag = 'scoped memory for tpu_custom_call.1']
    #allocation5 [shape = 'u8[65536]{0}', space=vmem, size = 0x10000, scoped, tag = 'input window, operand 1, single buffered']
    #allocation6 [shape = 's32[1]{0}', space=sflag, size = 0x4, scoped, tag = 'scoped memory for tpu_custom_call.1']
    #allocation7 [shape = 'u8[1024]{0}', space=vmem, size = 0x400, scoped, tag = 'input window, operand 2, single buffered']
    #allocation8 [shape = 'u8[393216]{0}', space=vmem, size = 0x60000, scoped, tag = 'input window, operand 3, single buffered']
    #allocation9 [shape = 's32[1]{0}', space=sflag, size = 0x4, scoped, tag = 'scoped memory for tpu_custom_call.1']
    #allocation10 [shape = 'u8[393216]{0}', space=vmem, size = 0x60000, scoped, tag = 'input window, operand 5, single buffered']
    #allocation11 [shape = 'u8[32768]{0}', space=vmem, size = 0x8000, scoped, tag = 'output window, operand 0']
    %12 = vsyncpa [#allocation3], 0
    %s13 = scalar_lea.sflag [#allocation3], 1
    %14 = vsyncpa %s13, 0
    %15 = vsyncpa [#allocation6], 0
    %16 = vsyncpa [#allocation9], 0
    %17 = vsyncpa [#allocation4], 0
    %s18 = scalar_lea.sflag [#allocation4], 1
    %19 = vsyncpa %s18, 0
    loop: start=0, step=1, limit=4
    $region2: #{tpu_custom_call.1} parent=1 // loop_pre_header
      _
    $region3: #{tpu_custom_call.1} parent=1 // loop_header
      %s21 = sphi 0, %s25
      %p22 = scmp.ge.s32.totalorder %s21, 4
      %s31 = sphi 0, %s33
      %s34 = sphi 0, %s31
      %s35 = sphi 0, %s34
      %s51 = sphi 0, %s35
      %s55 = sphi 0, %s55
      %s57 = sphi 0, %s55
      %s58 = sphi 0, %s57
      %s72 = sphi 0, %s58
      %s76 = sphi 0, %s76
      %s78 = sphi 0, %s76
      %s79 = sphi 0, %s78
      %s93 = sphi 0, %s79
      %s97 = sphi 0, %s97
      %s99 = sphi 0, %s97
      %s100 = sphi 0, %s99
      %s114 = sphi 0, %s100
      %s118 = sphi 0, %s118
      %s120 = sphi 0, %s118
      %s121 = sphi 0, %s120
      %s135 = sphi 0, %s121
      %s139 = sphi 0, %s139
      %s141 = sphi 0, %s139
      %s142 = sphi 0, %s141
      %s156 = sphi 0, %s142
      %s160 = sphi 0, %s160
      %s162 = sphi 0, %s160
      %s163 = sphi 0, %s162
      %s177 = sphi 0, %s163
      %s183 = sphi 0, %s185
      %s186 = sphi 0, %s183
      %s187 = sphi 0, %s186
      %s203 = sphi 0, %s187
    $region4: #{tpu_custom_call.1} parent=1 // loop_header_branch
      %24 = sbr.rel (%p22) target = $region8
    $region5: #{tpu_custom_call.1} parent=1 // loop_body
      %s26 = ssub.s32 %s21, 1
      %s27 = ssub.s32 %s21, 2
      %s28 = sadd.s32 %s21, 1
      %s29 = ssub.s32 %s21, %s28
      %p30 = scmp.eq.s32.totalorder %s29, 0
      %s32 = sadd.s32 %s31, 1
      %s33 = scalar_select %p30, %s31, %s32
      %p36 = pneg %p30
      %p37 = scmp.eq.s32.totalorder %s21, 1
      %p38 = por %p36, %p37
      %p39 = scmp.ne.s32.totalorder %s31, %s34
      %p40 = scmp.eq.s32.totalorder %s21, 0
      %p41 = por %p39, %p40
      %p42 = scmp.ne.s32.totalorder %s31, %s34
      %p43 = scmp.eq.s32.totalorder %s26, 1
      %p44 = por %p42, %p43
      %p45 = scmp.ne.s32.totalorder %s34, %s35
      %p46 = scmp.eq.s32.totalorder %s26, 0
      %p47 = por %p45, %p46
      %p48 = scmp.ne.s32.totalorder %s34, %s35
      %p49 = scmp.eq.s32.totalorder %s27, 1
      %p50 = por %p48, %p49
      %p52 = scmp.ne.s32.totalorder %s35, %s51
      %p53 = scmp.eq.s32.totalorder %s27, 0
      %p54 = por %p52, %p53
      %s56 = sadd.s32 %s55, 1
      %p59 = scmp.eq.s32.totalorder %s21, 1
      %p60 = scmp.ne.s32.totalorder %s55, %s57
      %p61 = scmp.eq.s32.totalorder %s21, 0
      %p62 = por %p60, %p61
      %p63 = scmp.ne.s32.totalorder %s55, %s57
      %p64 = scmp.eq.s32.totalorder %s26, 1
      %p65 = por %p63, %p64
      %p66 = scmp.ne.s32.totalorder %s57, %s58
      %p67 = scmp.eq.s32.totalorder %s26, 0
      %p68 = por %p66, %p67
      %p69 = scmp.ne.s32.totalorder %s57, %s58
      %p70 = scmp.eq.s32.totalorder %s27, 1
      %p71 = por %p69, %p70
      %p73 = scmp.ne.s32.totalorder %s58, %s72
      %p74 = scmp.eq.s32.totalorder %s27, 0
      %p75 = por %p73, %p74
      %s77 = sadd.s32 %s76, 1
      %p80 = scmp.eq.s32.totalorder %s21, 1
      %p81 = scmp.ne.s32.totalorder %s76, %s78
      %p82 = scmp.eq.s32.totalorder %s21, 0
      %p83 = por %p81, %p82
      %p84 = scmp.ne.s32.totalorder %s76, %s78
      %p85 = scmp.eq.s32.totalorder %s26, 1
      %p86 = por %p84, %p85
      %p87 = scmp.ne.s32.totalorder %s78, %s79
      %p88 = scmp.eq.s32.totalorder %s26, 0
      %p89 = por %p87, %p88
      %p90 = scmp.ne.s32.totalorder %s78, %s79
      %p91 = scmp.eq.s32.totalorder %s27, 1
      %p92 = por %p90, %p91
      %p94 = scmp.ne.s32.totalorder %s79, %s93
      %p95 = scmp.eq.s32.totalorder %s27, 0
      %p96 = por %p94, %p95
      %s98 = sadd.s32 %s97, 1
      %p101 = scmp.eq.s32.totalorder %s21, 1
      %p102 = scmp.ne.s32.totalorder %s97, %s99
      %p103 = scmp.eq.s32.totalorder %s21, 0
      %p104 = por %p102, %p103
      %p105 = scmp.ne.s32.totalorder %s97, %s99
      %p106 = scmp.eq.s32.totalorder %s26, 1
      %p107 = por %p105, %p106
      %p108 = scmp.ne.s32.totalorder %s99, %s100
      %p109 = scmp.eq.s32.totalorder %s26, 0
      %p110 = por %p108, %p109
      %p111 = scmp.ne.s32.totalorder %s99, %s100
      %p112 = scmp.eq.s32.totalorder %s27, 1
      %p113 = por %p111, %p112
      %p115 = scmp.ne.s32.totalorder %s100, %s114
      %p116 = scmp.eq.s32.totalorder %s27, 0
      %p117 = por %p115, %p116
      %s119 = sadd.s32 %s118, 1
      %p122 = scmp.eq.s32.totalorder %s21, 1
      %p123 = scmp.ne.s32.totalorder %s118, %s120
      %p124 = scmp.eq.s32.totalorder %s21, 0
      %p125 = por %p123, %p124
      %p126 = scmp.ne.s32.totalorder %s118, %s120
      %p127 = scmp.eq.s32.totalorder %s26, 1
      %p128 = por %p126, %p127
      %p129 = scmp.ne.s32.totalorder %s120, %s121
      %p130 = scmp.eq.s32.totalorder %s26, 0
      %p131 = por %p129, %p130
      %p132 = scmp.ne.s32.totalorder %s120, %s121
      %p133 = scmp.eq.s32.totalorder %s27, 1
      %p134 = por %p132, %p133
      %p136 = scmp.ne.s32.totalorder %s121, %s135
      %p137 = scmp.eq.s32.totalorder %s27, 0
      %p138 = por %p136, %p137
      %s140 = sadd.s32 %s139, 1
      %p143 = scmp.eq.s32.totalorder %s21, 1
      %p144 = scmp.ne.s32.totalorder %s139, %s141
      %p145 = scmp.eq.s32.totalorder %s21, 0
      %p146 = por %p144, %p145
      %p147 = scmp.ne.s32.totalorder %s139, %s141
      %p148 = scmp.eq.s32.totalorder %s26, 1
      %p149 = por %p147, %p148
      %p150 = scmp.ne.s32.totalorder %s141, %s142
      %p151 = scmp.eq.s32.totalorder %s26, 0
      %p152 = por %p150, %p151
      %p153 = scmp.ne.s32.totalorder %s141, %s142
      %p154 = scmp.eq.s32.totalorder %s27, 1
      %p155 = por %p153, %p154
      %p157 = scmp.ne.s32.totalorder %s142, %s156
      %p158 = scmp.eq.s32.totalorder %s27, 0
      %p159 = por %p157, %p158
      %s161 = sadd.s32 %s160, 1
      %p164 = scmp.eq.s32.totalorder %s21, 1
      %p165 = scmp.ne.s32.totalorder %s160, %s162
      %p166 = scmp.eq.s32.totalorder %s21, 0
      %p167 = por %p165, %p166
      %p168 = scmp.ne.s32.totalorder %s160, %s162
      %p169 = scmp.eq.s32.totalorder %s26, 1
      %p170 = por %p168, %p169
      %p171 = scmp.ne.s32.totalorder %s162, %s163
      %p172 = scmp.eq.s32.totalorder %s26, 0
      %p173 = por %p171, %p172
      %p174 = scmp.ne.s32.totalorder %s162, %s163
      %p175 = scmp.eq.s32.totalorder %s27, 1
      %p176 = por %p174, %p175
      %p178 = scmp.ne.s32.totalorder %s163, %s177
      %p179 = scmp.eq.s32.totalorder %s27, 0
      %p180 = por %p178, %p179
      %s181 = ssub.s32 %s21, %s28
      %p182 = scmp.eq.s32.totalorder %s181, 0
      %s184 = sadd.s32 %s183, 1
      %s185 = scalar_select %p182, %s183, %s184
      %p188 = pneg %p182
      %p189 = scmp.eq.s32.totalorder %s21, 1
      %p190 = por %p188, %p189
      %p191 = scmp.ne.s32.totalorder %s183, %s186
      %p192 = scmp.eq.s32.totalorder %s21, 0
      %p193 = por %p191, %p192
      %p194 = scmp.ne.s32.totalorder %s183, %s186
      %p195 = scmp.eq.s32.totalorder %s26, 1
      %p196 = por %p194, %p195
      %p197 = scmp.ne.s32.totalorder %s186, %s187
      %p198 = scmp.eq.s32.totalorder %s26, 0
      %p199 = por %p197, %p198
      %p200 = scmp.ne.s32.totalorder %s186, %s187
      %p201 = scmp.eq.s32.totalorder %s27, 1
      %p202 = por %p200, %p201
      %p204 = scmp.ne.s32.totalorder %s187, %s203
      %p205 = scmp.eq.s32.totalorder %s27, 0
      %p206 = por %p204, %p205
      %p207 = scmp.le.s32.totalorder 1, %s21
      %p208 = scmp.lt.s32.totalorder %s21, 3
      %p209 = pnand %p207, %p208
      %p210 = pneg %p209
      // Predicated region
      $region9: #{tpu_custom_call.1} parent=5 // pred_check
        _
      $region10: #{tpu_custom_call.1} parent=5 // pred_check_branch
        %212 = sbr.rel (%p209) target = $region12
      $region11: #{tpu_custom_call.1} parent=5 // pred_region
        %s213 = ssub.s32 %s21, 1
        // Predicated region
        $region13: #{tpu_custom_call.1} parent=11 // pred_check
          %p214 = pneg %p68
        $region14: #{tpu_custom_call.1} parent=11 // pred_check_branch
          %216 = sbr.rel (%p214) target = $region16
        $region15: #{tpu_custom_call.1} parent=11 // pred_region
          %218 = vsyncadd [#allocation6], 0
          %s219 = sshll.u32 %s1, 4
          %s220 = int_to_ptr.hbm [resolvable:$true] %s219
          %s221 = sshll.u32 [#allocation5], 4
          %s222 = int_to_ptr.vmem [resolvable:$true] %s221
          %227 = dma.hbm_to_vmem [thread:$0]  %s220, 2048, %s222, [#allocation6], 128, 128, 8
        $region16: #{tpu_custom_call.1} parent=11 // pred_fallthru
          _
        // Predicated region
        $region17: #{tpu_custom_call.1} parent=11 // pred_check
          %p228 = pneg %p89
        $region18: #{tpu_custom_call.1} parent=11 // pred_check_branch
          %230 = sbr.rel (%p228) target = $region20
        $region19: #{tpu_custom_call.1} parent=11 // pred_region
          %232 = vsyncadd [#allocation6], 0
          %s234 = sshll.u32 %s2, 4
          %s235 = int_to_ptr.hbm [resolvable:$true] %s234
          %s236 = sshll.u32 [#allocation7], 4
          %s237 = int_to_ptr.vmem [resolvable:$true] %s236
          %239 = dma.hbm_to_vmem [thread:$0]  %s235, 32, %s237, [#allocation6]
        $region20: #{tpu_custom_call.1} parent=11 // pred_fallthru
          _
        // Predicated region
        $region21: #{tpu_custom_call.1} parent=11 // pred_check
          %p240 = pneg %p110
        $region22: #{tpu_custom_call.1} parent=11 // pred_check_branch
          %242 = sbr.rel (%p240) target = $region24
        $region23: #{tpu_custom_call.1} parent=11 // pred_region
          %244 = vsyncadd [#allocation9], 0
          %s245 = sshll.u32 %s3, 4
          %s246 = int_to_ptr.hbm [resolvable:$true] %s245
          %s247 = sshll.u32 [#allocation8], 4
          %s248 = int_to_ptr.vmem [resolvable:$true] %s247
          %253 = dma.hbm_to_vmem [thread:$0]  %s246, 12288, %s248, [#allocation9], 128, 128, 8
        $region24: #{tpu_custom_call.1} parent=11 // pred_fallthru
          _
        // Predicated region
        $region25: #{tpu_custom_call.1} parent=11 // pred_check
          %p254 = pneg %p131
        $region26: #{tpu_custom_call.1} parent=11 // pred_check_branch
          %256 = sbr.rel (%p254) target = $region28
        $region27: #{tpu_custom_call.1} parent=11 // pred_region
          _
        $region28: #{tpu_custom_call.1} parent=11 // pred_fallthru
          _
        // Predicated region
        $region29: #{tpu_custom_call.1} parent=11 // pred_check
          %p257 = pneg %p152
        $region30: #{tpu_custom_call.1} parent=11 // pred_check_branch
          %259 = sbr.rel (%p257) target = $region32
        $region31: #{tpu_custom_call.1} parent=11 // pred_region
          %261 = vsyncadd [#allocation9], 0
          %s262 = sshll.u32 %s5, 4
          %s263 = int_to_ptr.hbm [resolvable:$true] %s262
          %s264 = sshll.u32 [#allocation10], 4
          %s265 = int_to_ptr.vmem [resolvable:$true] %s264
          %270 = dma.hbm_to_vmem [thread:$0]  %s263, 12288, %s265, [#allocation9], 128, 128, 8
        $region32: #{tpu_custom_call.1} parent=11 // pred_fallthru
          _
        // Predicated region
        $region33: #{tpu_custom_call.1} parent=11 // pred_check
          %p271 = pneg %p173
        $region34: #{tpu_custom_call.1} parent=11 // pred_check_branch
          %273 = sbr.rel (%p271) target = $region36
        $region35: #{tpu_custom_call.1} parent=11 // pred_region
          _
        $region36: #{tpu_custom_call.1} parent=11 // pred_fallthru
          _
      $region12: #{tpu_custom_call.1} parent=5 // pred_fallthru
        _
      %p274 = scmp.lt.s32.totalorder %s21, 2
      // Predicated region
      $region37: #{tpu_custom_call.1} parent=5 // pred_check
        %p275 = pneg %p274
      $region38: #{tpu_custom_call.1} parent=5 // pred_check_branch
        %277 = sbr.rel (%p275) target = $region40
      $region39: #{tpu_custom_call.1} parent=5 // pred_region
        // Predicated region
        $region41: #{tpu_custom_call.1} parent=39 // pred_check
          %p278 = pneg %p41
        $region42: #{tpu_custom_call.1} parent=39 // pred_check_branch
          %280 = sbr.rel (%p278) target = $region44
        $region43: #{tpu_custom_call.1} parent=39 // pred_region
          %s281 = sand.u32 %s31, 1
          %s282 = scalar_lea.sflag [#allocation3], %s281
          %s283 = sand.u32 %s31, 1
          %s284 = smul.addr %s283, 8
          %s285 = scalar_lea.vmem [#allocation2], %s284
          %s286 = smul.u32 2, %s21
          %288 = vsyncadd %s282, 0
          %s289 = smul.addr %s286, 4
          %s290 = scalar_lea.hbm %s0, %s289
          %s291 = sshll.u32 %s290, 4
          %s292 = int_to_ptr.hbm [resolvable:$true] %s291
          %s293 = sshll.u32 %s285, 4
          %s294 = int_to_ptr.vmem [resolvable:$true] %s293
          %299 = dma.hbm_to_vmem [thread:$0]  %s292, 128, %s294, %s282, 64, 64, 4
        $region44: #{tpu_custom_call.1} parent=39 // pred_fallthru
          _
      $region40: #{tpu_custom_call.1} parent=5 // pred_fallthru
        _
      %p300 = scmp.le.s32.totalorder 1, %s21
      %p301 = scmp.lt.s32.totalorder %s21, 3
      %p302 = pnand %p300, %p301
      %p303 = pneg %p302
      // Predicated region
      $region45: #{tpu_custom_call.1} parent=5 // pred_check
        _
      $region46: #{tpu_custom_call.1} parent=5 // pred_check_branch
        %305 = sbr.rel (%p302) target = $region48
      $region47: #{tpu_custom_call.1} parent=5 // pred_region
        %s306 = ssub.s32 %s21, 1
        %s307 = sand.u32 %s34, 1
        %s308 = scalar_lea.sflag [#allocation3], %s307
        %s309 = sand.u32 %s34, 1
        %s310 = smul.addr %s309, 8
        %s311 = scalar_lea.vmem [#allocation2], %s310
        // Predicated region
        $region49: #{tpu_custom_call.1} parent=47 // pred_check
          %p312 = pneg %p47
        $region50: #{tpu_custom_call.1} parent=47 // pred_check_branch
          %314 = sbr.rel (%p312) target = $region52
        $region51: #{tpu_custom_call.1} parent=47 // pred_region
          %316 = dma.done %s308, 128
        $region52: #{tpu_custom_call.1} parent=47 // pred_fallthru
          _
        // Predicated region
        $region53: #{tpu_custom_call.1} parent=47 // pred_check
          %p317 = pneg %p68
        $region54: #{tpu_custom_call.1} parent=47 // pred_check_branch
          %319 = sbr.rel (%p317) target = $region56
        $region55: #{tpu_custom_call.1} parent=47 // pred_region
          %321 = dma.done [#allocation6], 2048
        $region56: #{tpu_custom_call.1} parent=47 // pred_fallthru
          _
        // Predicated region
        $region57: #{tpu_custom_call.1} parent=47 // pred_check
          %p322 = pneg %p89
        $region58: #{tpu_custom_call.1} parent=47 // pred_check_branch
          %324 = sbr.rel (%p322) target = $region60
        $region59: #{tpu_custom_call.1} parent=47 // pred_region
          %326 = dma.done [#allocation6], 32
        $region60: #{tpu_custom_call.1} parent=47 // pred_fallthru
          _
        // Predicated region
        $region61: #{tpu_custom_call.1} parent=47 // pred_check
          %p327 = pneg %p110
        $region62: #{tpu_custom_call.1} parent=47 // pred_check_branch
          %329 = sbr.rel (%p327) target = $region64
        $region63: #{tpu_custom_call.1} parent=47 // pred_region
          %331 = dma.done [#allocation9], 12288
        $region64: #{tpu_custom_call.1} parent=47 // pred_fallthru
          _
        // Predicated region
        $region65: #{tpu_custom_call.1} parent=47 // pred_check
          %p332 = pneg %p152
        $region66: #{tpu_custom_call.1} parent=47 // pred_check_branch
          %334 = sbr.rel (%p332) target = $region68
        $region67: #{tpu_custom_call.1} parent=47 // pred_region
          %336 = dma.done [#allocation9], 12288
        $region68: #{tpu_custom_call.1} parent=47 // pred_fallthru
          _
        %s337 = sand.u32 %s34, 1
        %s338 = scalar_lea.sflag [#allocation3], %s337
        %s339 = sand.u32 %s34, 1
        %s340 = smul.addr %s339, 8
        %s341 = scalar_lea.vmem [#allocation2], %s340
        %p342 = pneg %p47
        %p343 = pneg %p44
        %p344 = pneg %p68
        %p345 = pneg %p65
        %p346 = pneg %p89
        %p347 = pneg %p86
        %p348 = pneg %p110
        %p349 = pneg %p107
        %p350 = pneg %p131
        %p351 = pneg %p128
        %p352 = pneg %p152
        %p353 = pneg %p149
        %p354 = pneg %p173
        %p355 = pneg %p170
        %p356 = pneg %p199
        %p357 = pneg %p196
        %s358 = sand.u32 %s186, 1
        %s359 = scalar_lea.sflag [#allocation4], %s358
        %s360 = sand.u32 %s186, 1
        %s361 = smul.addr %s360, 32
        %s362 = scalar_lea.vmem [#allocation11], %s361
        %s363 = smul.u32 2, %s26
        %s364 = smul.u32 2, %s26
        %v365 = vlaneseq
        %v366 = vshrl.u32 %v365, 7
        %v367 = vadd.s32 %v366, 8
        %vm368 = vcmp.lt.s32.totalorder %v366, 0
        %v369 = vsub.s32 0, %v366
        %v370 = vsel %vm368, %v369, %v366
        %v371 = vshrl.u32 %v370, 4
        %v372 = vand.u32 %v370, 15
        %v373 = vsub.s32 0, %v372
        %v374 = vsel %vm368, %v373, %v372
        %vm375 = vcmp.lt.s32.totalorder %v367, 0
        %v376 = vsub.s32 0, %v367
        %v377 = vsel %vm375, %v376, %v367
        %v378 = vshrl.u32 %v377, 4
        %v379 = vand.u32 %v377, 15
        %v380 = vsub.s32 0, %v379
        %v381 = vsel %vm375, %v380, %v379
        %vm382 = vcmp.ne.s32.totalorder %v374, 0
        %vm383 = vcmp.ne.s32.totalorder %v381, 0
        %vm384 = vcmp.lt.s32.totalorder %v374, 0
        %vm385 = vcmp.lt.s32.totalorder %v381, 0
        %vm386 = vmand %vm384, %vm382
        %vm387 = vmand %vm385, %vm383
        %v388 = vadd.s32 %v374, 16
        %v389 = vadd.s32 %v381, 16
        %v390 = vsel %vm386, %v388, %v374
        %v391 = vsel %vm387, %v389, %v381
        %vm392 = vcmp.ge.s32.totalorder %v390, 1
        %vm393 = vcmp.ge.s32.totalorder %v391, 1
        %vm394 = vcmp.le.s32.totalorder %v390, 14
        %vm395 = vcmp.le.s32.totalorder %v391, 14
        %vm396 = vmand %vm392, %vm394
        %vm397 = vmand %vm393, %vm395
        %v398 = vsel %vm396, 1, 0
        %v399 = vsel %vm397, 1, 0
        %v400 = vcvt.s32.f32 %v398
        %v401 = vcvt.s32.f32 %v399
        %v402 = vld [vmem:[#allocation5] sm:$0xff]
        %v403 = vld [vmem:[#allocation5 + $0x8] sm:$0xff]
        %v404 = vld [vmem:[#allocation5 + $0x10] sm:$0xff]
        %v405 = vld [vmem:[#allocation5 + $0x18] sm:$0xff]
        %v406 = vld [vmem:[#allocation5 + $0x20] sm:$0xff]
        %v407 = vld [vmem:[#allocation5 + $0x28] sm:$0xff]
        %v408 = vld [vmem:[#allocation5 + $0x30] sm:$0xff]
        %v409 = vld [vmem:[#allocation5 + $0x38] sm:$0xff]
        %v410 = vld [vmem:[#allocation5 + $0x40] sm:$0xff]
        %v411 = vld [vmem:[#allocation5 + $0x48] sm:$0xff]
        %v412 = vld [vmem:[#allocation5 + $0x50] sm:$0xff]
        %v413 = vld [vmem:[#allocation5 + $0x58] sm:$0xff]
        %v414 = vld [vmem:[#allocation5 + $0x60] sm:$0xff]
        %v415 = vld [vmem:[#allocation5 + $0x68] sm:$0xff]
        %v416 = vld [vmem:[#allocation5 + $0x70] sm:$0xff]
        %v417 = vld [vmem:[#allocation5 + $0x78] sm:$0xff]
        %v418 = vld [vmem:[#allocation7] sm:$0x3]
        %v419 = vld [vmem:[%s4] sm:$0x3]
        %v420 = vld [vmem:[%s6] sm:$0x3]
        %v421 = vld [vmem:[#allocation8] sm:$0xff]
        %v422 = vld [vmem:[#allocation8 + $0x8] sm:$0xff]
        %v423 = vld [vmem:[#allocation8 + $0x10] sm:$0xff]
        %v424 = vld [vmem:[#allocation8 + $0x18] sm:$0xff]
        %v425 = vld [vmem:[#allocation8 + $0x20] sm:$0xff]
        %v426 = vld [vmem:[#allocation8 + $0x28] sm:$0xff]
        %v427 = vld [vmem:[#allocation8 + $0x30] sm:$0xff]
        %v428 = vld [vmem:[#allocation8 + $0x38] sm:$0xff]
        %v429 = vld [vmem:[#allocation8 + $0x40] sm:$0xff]
        %v430 = vld [vmem:[#allocation8 + $0x48] sm:$0xff]
        %v431 = vld [vmem:[#allocation8 + $0x50] sm:$0xff]
        %v432 = vld [vmem:[#allocation8 + $0x58] sm:$0xff]
        %v433 = vld [vmem:[#allocation8 + $0x60] sm:$0xff]
        %v434 = vld [vmem:[#allocation8 + $0x68] sm:$0xff]
        %v435 = vld [vmem:[#allocation8 + $0x70] sm:$0xff]
        %v436 = vld [vmem:[#allocation8 + $0x78] sm:$0xff]
        %v437 = vld [vmem:[#allocation8 + $0x80] sm:$0xff]
        %v438 = vld [vmem:[#allocation8 + $0x88] sm:$0xff]
        %v439 = vld [vmem:[#allocation8 + $0x90] sm:$0xff]
        %v440 = vld [vmem:[#allocation8 + $0x98] sm:$0xff]
        %v441 = vld [vmem:[#allocation8 + $0xa0] sm:$0xff]
        %v442 = vld [vmem:[#allocation8 + $0xa8] sm:$0xff]
        %v443 = vld [vmem:[#allocation8 + $0xb0] sm:$0xff]
        %v444 = vld [vmem:[#allocation8 + $0xb8] sm:$0xff]
        %v445 = vld [vmem:[#allocation8 + $0xc0] sm:$0xff]
        %v446 = vld [vmem:[#allocation8 + $0xc8] sm:$0xff]
        %v447 = vld [vmem:[#allocation8 + $0xd0] sm:$0xff]
        %v448 = vld [vmem:[#allocation8 + $0xd8] sm:$0xff]
        %v449 = vld [vmem:[#allocation8 + $0xe0] sm:$0xff]
        %v450 = vld [vmem:[#allocation8 + $0xe8] sm:$0xff]
        %v451 = vld [vmem:[#allocation8 + $0xf0] sm:$0xff]
        %v452 = vld [vmem:[#allocation8 + $0xf8] sm:$0xff]
        %s453 = scalar_lea.vmem [#allocation8], 256
        %v454 = vld [vmem:[%s453] sm:$0xff]
        %v455 = vld [vmem:[%s453 + $0x8] sm:$0xff]
        %v456 = vld [vmem:[%s453 + $0x10] sm:$0xff]
        %v457 = vld [vmem:[%s453 + $0x18] sm:$0xff]
        %v458 = vld [vmem:[%s453 + $0x20] sm:$0xff]
        %v459 = vld [vmem:[%s453 + $0x28] sm:$0xff]
        %v460 = vld [vmem:[%s453 + $0x30] sm:$0xff]
        %v461 = vld [vmem:[%s453 + $0x38] sm:$0xff]
        %v462 = vld [vmem:[%s453 + $0x40] sm:$0xff]
        %v463 = vld [vmem:[%s453 + $0x48] sm:$0xff]
        %v464 = vld [vmem:[%s453 + $0x50] sm:$0xff]
        %v465 = vld [vmem:[%s453 + $0x58] sm:$0xff]
        %v466 = vld [vmem:[%s453 + $0x60] sm:$0xff]
        %v467 = vld [vmem:[%s453 + $0x68] sm:$0xff]
        %v468 = vld [vmem:[%s453 + $0x70] sm:$0xff]
        %v469 = vld [vmem:[%s453 + $0x78] sm:$0xff]
        %v470 = vld [vmem:[%s453 + $0x80] sm:$0xff]
        %v471 = vld [vmem:[%s453 + $0x88] sm:$0xff]
        %v472 = vld [vmem:[%s453 + $0x90] sm:$0xff]
        %v473 = vld [vmem:[%s453 + $0x98] sm:$0xff]
        %v474 = vld [vmem:[%s453 + $0xa0] sm:$0xff]
        %v475 = vld [vmem:[%s453 + $0xa8] sm:$0xff]
        %v476 = vld [vmem:[%s453 + $0xb0] sm:$0xff]
        %v477 = vld [vmem:[%s453 + $0xb8] sm:$0xff]
        %v478 = vld [vmem:[%s453 + $0xc0] sm:$0xff]
        %v479 = vld [vmem:[%s453 + $0xc8] sm:$0xff]
        %v480 = vld [vmem:[%s453 + $0xd0] sm:$0xff]
        %v481 = vld [vmem:[%s453 + $0xd8] sm:$0xff]
        %v482 = vld [vmem:[%s453 + $0xe0] sm:$0xff]
        %v483 = vld [vmem:[%s453 + $0xe8] sm:$0xff]
        %v484 = vld [vmem:[%s453 + $0xf0] sm:$0xff]
        %v485 = vld [vmem:[%s453 + $0xf8] sm:$0xff]
        %s486 = scalar_lea.vmem [#allocation8], 512
        %v487 = vld [vmem:[%s486] sm:$0xff]
        %v488 = vld [vmem:[%s486 + $0x8] sm:$0xff]
        %v489 = vld [vmem:[%s486 + $0x10] sm:$0xff]
        %v490 = vld [vmem:[%s486 + $0x18] sm:$0xff]
        %v491 = vld [vmem:[%s486 + $0x20] sm:$0xff]
        %v492 = vld [vmem:[%s486 + $0x28] sm:$0xff]
        %v493 = vld [vmem:[%s486 + $0x30] sm:$0xff]
        %v494 = vld [vmem:[%s486 + $0x38] sm:$0xff]
        %v495 = vld [vmem:[%s486 + $0x40] sm:$0xff]
        %v496 = vld [vmem:[%s486 + $0x48] sm:$0xff]
        %v497 = vld [vmem:[%s486 + $0x50] sm:$0xff]
        %v498 = vld [vmem:[%s486 + $0x58] sm:$0xff]
        %v499 = vld [vmem:[%s486 + $0x60] sm:$0xff]
        %v500 = vld [vmem:[%s486 + $0x68] sm:$0xff]
        %v501 = vld [vmem:[%s486 + $0x70] sm:$0xff]
        %v502 = vld [vmem:[%s486 + $0x78] sm:$0xff]
        %v503 = vld [vmem:[%s486 + $0x80] sm:$0xff]
        %v504 = vld [vmem:[%s486 + $0x88] sm:$0xff]
        %v505 = vld [vmem:[%s486 + $0x90] sm:$0xff]
        %v506 = vld [vmem:[%s486 + $0x98] sm:$0xff]
        %v507 = vld [vmem:[%s486 + $0xa0] sm:$0xff]
        %v508 = vld [vmem:[%s486 + $0xa8] sm:$0xff]
        %v509 = vld [vmem:[%s486 + $0xb0] sm:$0xff]
        %v510 = vld [vmem:[%s486 + $0xb8] sm:$0xff]
        %v511 = vld [vmem:[%s486 + $0xc0] sm:$0xff]
        %v512 = vld [vmem:[%s486 + $0xc8] sm:$0xff]
        %v513 = vld [vmem:[%s486 + $0xd0] sm:$0xff]
        %v514 = vld [vmem:[%s486 + $0xd8] sm:$0xff]
        %v515 = vld [vmem:[%s486 + $0xe0] sm:$0xff]
        %v516 = vld [vmem:[%s486 + $0xe8] sm:$0xff]
        %v517 = vld [vmem:[%s486 + $0xf0] sm:$0xff]
        %v518 = vld [vmem:[%s486 + $0xf8] sm:$0xff]
        %v519 = vld [vmem:[#allocation10] sm:$0xff]
        %v520 = vld [vmem:[#allocation10 + $0x8] sm:$0xff]
        %v521 = vld [vmem:[#allocation10 + $0x10] sm:$0xff]
        %v522 = vld [vmem:[#allocation10 + $0x18] sm:$0xff]
        %v523 = vld [vmem:[#allocation10 + $0x20] sm:$0xff]
        %v524 = vld [vmem:[#allocation10 + $0x28] sm:$0xff]
        %v525 = vld [vmem:[#allocation10 + $0x30] sm:$0xff]
        %v526 = vld [vmem:[#allocation10 + $0x38] sm:$0xff]
        %v527 = vld [vmem:[#allocation10 + $0x40] sm:$0xff]
        %v528 = vld [vmem:[#allocation10 + $0x48] sm:$0xff]
        %v529 = vld [vmem:[#allocation10 + $0x50] sm:$0xff]
        %v530 = vld [vmem:[#allocation10 + $0x58] sm:$0xff]
        %v531 = vld [vmem:[#allocation10 + $0x60] sm:$0xff]
        %v532 = vld [vmem:[#allocation10 + $0x68] sm:$0xff]
        %v533 = vld [vmem:[#allocation10 + $0x70] sm:$0xff]
        %v534 = vld [vmem:[#allocation10 + $0x78] sm:$0xff]
        %v535 = vld [vmem:[#allocation10 + $0x80] sm:$0xff]
        %v536 = vld [vmem:[#allocation10 + $0x88] sm:$0xff]
        %v537 = vld [vmem:[#allocation10 + $0x90] sm:$0xff]
        %v538 = vld [vmem:[#allocation10 + $0x98] sm:$0xff]
        %v539 = vld [vmem:[#allocation10 + $0xa0] sm:$0xff]
        %v540 = vld [vmem:[#allocation10 + $0xa8] sm:$0xff]
        %v541 = vld [vmem:[#allocation10 + $0xb0] sm:$0xff]
        %v542 = vld [vmem:[#allocation10 + $0xb8] sm:$0xff]
        %v543 = vld [vmem:[#allocation10 + $0xc0] sm:$0xff]
        %v544 = vld [vmem:[#allocation10 + $0xc8] sm:$0xff]
        %v545 = vld [vmem:[#allocation10 + $0xd0] sm:$0xff]
        %v546 = vld [vmem:[#allocation10 + $0xd8] sm:$0xff]
        %v547 = vld [vmem:[#allocation10 + $0xe0] sm:$0xff]
        %v548 = vld [vmem:[#allocation10 + $0xe8] sm:$0xff]
        %v549 = vld [vmem:[#allocation10 + $0xf0] sm:$0xff]
        %v550 = vld [vmem:[#allocation10 + $0xf8] sm:$0xff]
        %s551 = scalar_lea.vmem [#allocation10], 256
        %v552 = vld [vmem:[%s551] sm:$0xff]
        %v553 = vld [vmem:[%s551 + $0x8] sm:$0xff]
        %v554 = vld [vmem:[%s551 + $0x10] sm:$0xff]
        %v555 = vld [vmem:[%s551 + $0x18] sm:$0xff]
        %v556 = vld [vmem:[%s551 + $0x20] sm:$0xff]
        %v557 = vld [vmem:[%s551 + $0x28] sm:$0xff]
        %v558 = vld [vmem:[%s551 + $0x30] sm:$0xff]
        %v559 = vld [vmem:[%s551 + $0x38] sm:$0xff]
        %v560 = vld [vmem:[%s551 + $0x40] sm:$0xff]
        %v561 = vld [vmem:[%s551 + $0x48] sm:$0xff]
        %v562 = vld [vmem:[%s551 + $0x50] sm:$0xff]
        %v563 = vld [vmem:[%s551 + $0x58] sm:$0xff]
        %v564 = vld [vmem:[%s551 + $0x60] sm:$0xff]
        %v565 = vld [vmem:[%s551 + $0x68] sm:$0xff]
        %v566 = vld [vmem:[%s551 + $0x70] sm:$0xff]
        %v567 = vld [vmem:[%s551 + $0x78] sm:$0xff]
        %v568 = vld [vmem:[%s551 + $0x80] sm:$0xff]
        %v569 = vld [vmem:[%s551 + $0x88] sm:$0xff]
        %v570 = vld [vmem:[%s551 + $0x90] sm:$0xff]
        %v571 = vld [vmem:[%s551 + $0x98] sm:$0xff]
        %v572 = vld [vmem:[%s551 + $0xa0] sm:$0xff]
        %v573 = vld [vmem:[%s551 + $0xa8] sm:$0xff]
        %v574 = vld [vmem:[%s551 + $0xb0] sm:$0xff]
        %v575 = vld [vmem:[%s551 + $0xb8] sm:$0xff]
        %v576 = vld [vmem:[%s551 + $0xc0] sm:$0xff]
        %v577 = vld [vmem:[%s551 + $0xc8] sm:$0xff]
        %v578 = vld [vmem:[%s551 + $0xd0] sm:$0xff]
        %v579 = vld [vmem:[%s551 + $0xd8] sm:$0xff]
        %v580 = vld [vmem:[%s551 + $0xe0] sm:$0xff]
        %v581 = vld [vmem:[%s551 + $0xe8] sm:$0xff]
        %v582 = vld [vmem:[%s551 + $0xf0] sm:$0xff]
        %v583 = vld [vmem:[%s551 + $0xf8] sm:$0xff]
        %s584 = scalar_lea.vmem [#allocation10], 512
        %v585 = vld [vmem:[%s584] sm:$0xff]
        %v586 = vld [vmem:[%s584 + $0x8] sm:$0xff]
        %v587 = vld [vmem:[%s584 + $0x10] sm:$0xff]
        %v588 = vld [vmem:[%s584 + $0x18] sm:$0xff]
        %v589 = vld [vmem:[%s584 + $0x20] sm:$0xff]
        %v590 = vld [vmem:[%s584 + $0x28] sm:$0xff]
        %v591 = vld [vmem:[%s584 + $0x30] sm:$0xff]
        %v592 = vld [vmem:[%s584 + $0x38] sm:$0xff]
        %v593 = vld [vmem:[%s584 + $0x40] sm:$0xff]
        %v594 = vld [vmem:[%s584 + $0x48] sm:$0xff]
        %v595 = vld [vmem:[%s584 + $0x50] sm:$0xff]
        %v596 = vld [vmem:[%s584 + $0x58] sm:$0xff]
        %v597 = vld [vmem:[%s584 + $0x60] sm:$0xff]
        %v598 = vld [vmem:[%s584 + $0x68] sm:$0xff]
        %v599 = vld [vmem:[%s584 + $0x70] sm:$0xff]
        %v600 = vld [vmem:[%s584 + $0x78] sm:$0xff]
        %v601 = vld [vmem:[%s584 + $0x80] sm:$0xff]
        %v602 = vld [vmem:[%s584 + $0x88] sm:$0xff]
        %v603 = vld [vmem:[%s584 + $0x90] sm:$0xff]
        %v604 = vld [vmem:[%s584 + $0x98] sm:$0xff]
        %v605 = vld [vmem:[%s584 + $0xa0] sm:$0xff]
        %v606 = vld [vmem:[%s584 + $0xa8] sm:$0xff]
        %v607 = vld [vmem:[%s584 + $0xb0] sm:$0xff]
        %v608 = vld [vmem:[%s584 + $0xb8] sm:$0xff]
        %v609 = vld [vmem:[%s584 + $0xc0] sm:$0xff]
        %v610 = vld [vmem:[%s584 + $0xc8] sm:$0xff]
        %v611 = vld [vmem:[%s584 + $0xd0] sm:$0xff]
        %v612 = vld [vmem:[%s584 + $0xd8] sm:$0xff]
        %v613 = vld [vmem:[%s584 + $0xe0] sm:$0xff]
        %v614 = vld [vmem:[%s584 + $0xe8] sm:$0xff]
        %v615 = vld [vmem:[%s584 + $0xf0] sm:$0xff]
        %v616 = vld [vmem:[%s584 + $0xf8] sm:$0xff]
        %v617 = vld [vmem:[%s311] sm:$0xf]
        %v618 = vld [vmem:[%s311 + $0x4] sm:$0xf]
        %v620 = vperm.slane %v418, 0
        %v621 = vperm.slane %v418, 1
        %v626 = vunpack.c.l.b16 %v617
        %v627 = vunpack.c.l.b16 %v618
        %v628 = vpack.c.b16 %v627, %v626
        %v646 = vunpack.c.l.b16 %v402
        %v647 = vunpack.c.h.b16 %v402
        %v648 = vunpack.c.l.b16 %v403
        %v649 = vunpack.c.h.b16 %v403
        %v650 = vunpack.c.l.b16 %v404
        %v651 = vunpack.c.h.b16 %v404
        %v652 = vunpack.c.l.b16 %v405
        %v653 = vunpack.c.h.b16 %v405
        %v654 = vunpack.c.l.b16 %v406
        %v655 = vunpack.c.h.b16 %v406
        %v656 = vunpack.c.l.b16 %v407
        %v657 = vunpack.c.h.b16 %v407
        %v658 = vunpack.c.l.b16 %v408
        %v659 = vunpack.c.h.b16 %v408
        %v660 = vunpack.c.l.b16 %v409
        %v661 = vunpack.c.h.b16 %v409
        %v662 = vunpack.c.l.b16 %v410
        %v663 = vunpack.c.h.b16 %v410
        %v664 = vunpack.c.l.b16 %v411
        %v665 = vunpack.c.h.b16 %v411
        %v666 = vunpack.c.l.b16 %v412
        %v667 = vunpack.c.h.b16 %v412
        %v668 = vunpack.c.l.b16 %v413
        %v669 = vunpack.c.h.b16 %v413
        %v670 = vunpack.c.l.b16 %v414
        %v671 = vunpack.c.h.b16 %v414
        %v672 = vunpack.c.l.b16 %v415
        %v673 = vunpack.c.h.b16 %v415
        %v674 = vunpack.c.l.b16 %v416
        %v675 = vunpack.c.h.b16 %v416
        %v676 = vunpack.c.l.b16 %v417
        %v677 = vunpack.c.h.b16 %v417
        %v678 = vpack.c.b16 %v648, %v646
        %v679 = vpack.c.b16 %v649, %v647
        %v680 = vpack.c.b16 %v652, %v650
        %v681 = vpack.c.b16 %v653, %v651
        %v682 = vpack.c.b16 %v656, %v654
        %v683 = vpack.c.b16 %v657, %v655
        %v684 = vpack.c.b16 %v660, %v658
        %v685 = vpack.c.b16 %v661, %v659
        %v686 = vpack.c.b16 %v664, %v662
        %v687 = vpack.c.b16 %v665, %v663
        %v688 = vpack.c.b16 %v668, %v666
        %v689 = vpack.c.b16 %v669, %v667
        %v690 = vpack.c.b16 %v672, %v670
        %v691 = vpack.c.b16 %v673, %v671
        %v692 = vpack.c.b16 %v676, %v674
        %v693 = vpack.c.b16 %v677, %v675
        %710 = vmatpush.bf16.msra.mxu0 %v692
        %711 = vmatpush.bf16.msra.mxu0 %v690
        %712 = vmatpush.bf16.msra.mxu0 %v688
        %713 = vmatpush.bf16.msra.mxu0 %v686
        %714 = vmatpush.bf16.msra.mxu0 %v684
        %715 = vmatpush.bf16.msra.mxu0 %v682
        %716 = vmatpush.bf16.msra.mxu0 %v680
        %717 = vmatpush.bf16.msra.mxu0 %v678
        %718 = vmatmul.bf16.gmra.mxu0 %v628
        %v719 = vpop.f32.mrf.mxu0
        %v720 = vadd.f32 %v620, %v719
        %v721 = vpop.f32.mrf.mxu0
        %v722 = vadd.f32 %v620, %v721
        %723 = vdwg.mxu0
        %724 = vmatpush.bf16.msra.mxu0 %v693
        %725 = vmatpush.bf16.msra.mxu0 %v691
        %726 = vmatpush.bf16.msra.mxu0 %v689
        %727 = vmatpush.bf16.msra.mxu0 %v687
        %728 = vmatpush.bf16.msra.mxu0 %v685
        %729 = vmatpush.bf16.msra.mxu0 %v683
        %730 = vmatpush.bf16.msra.mxu0 %v681
        %731 = vmatpush.bf16.msra.mxu0 %v679
        %732 = vmatmul.bf16.gmra.mxu0 %v628
        %v733 = vpop.f32.mrf.mxu0
        %v734 = vadd.f32 %v621, %v733
        %v735 = vpop.f32.mrf.mxu0
        %v736 = vadd.f32 %v621, %v735
        %737 = vdwg.mxu0
        %v738 = vmax.f32 %v720, 0.0
        %v739 = vmax.f32 %v734, 0.0
        %v740 = vmax.f32 %v722, 0.0
        %v741 = vmax.f32 %v736, 0.0
        %v742 = vmul.f32 %v738, %v400
        %v743 = vmul.f32 %v739, %v400
        %v744 = vmul.f32 %v740, %v401
        %v745 = vmul.f32 %v741, %v401
        %v746 = vpack.c.bf16 %v744, %v742
        %v747 = vpack.c.bf16 %v745, %v743
        %v780 = vunpack.c.l.b16 %v421
        %v781 = vunpack.c.h.b16 %v421
        %v782 = vunpack.c.l.b16 %v422
        %v783 = vunpack.c.h.b16 %v422
        %v784 = vunpack.c.l.b16 %v423
        %v785 = vunpack.c.h.b16 %v423
        %v786 = vunpack.c.l.b16 %v424
        %v787 = vunpack.c.h.b16 %v424
        %v788 = vunpack.c.l.b16 %v425
        %v789 = vunpack.c.h.b16 %v425
        %v790 = vunpack.c.l.b16 %v426
        %v791 = vunpack.c.h.b16 %v426
        %v792 = vunpack.c.l.b16 %v427
        %v793 = vunpack.c.h.b16 %v427
        %v794 = vunpack.c.l.b16 %v428
        %v795 = vunpack.c.h.b16 %v428
        %v796 = vunpack.c.l.b16 %v429
        %v797 = vunpack.c.h.b16 %v429
        %v798 = vunpack.c.l.b16 %v430
        %v799 = vunpack.c.h.b16 %v430
        %v800 = vunpack.c.l.b16 %v431
        %v801 = vunpack.c.h.b16 %v431
        %v802 = vunpack.c.l.b16 %v432
        %v803 = vunpack.c.h.b16 %v432
        %v804 = vunpack.c.l.b16 %v433
        %v805 = vunpack.c.h.b16 %v433
        %v806 = vunpack.c.l.b16 %v434
        %v807 = vunpack.c.h.b16 %v434
        %v808 = vunpack.c.l.b16 %v435
        %v809 = vunpack.c.h.b16 %v435
        %v810 = vunpack.c.l.b16 %v436
        %v811 = vunpack.c.h.b16 %v436
        %v812 = vunpack.c.l.b16 %v437
        %v813 = vunpack.c.h.b16 %v437
        %v814 = vunpack.c.l.b16 %v438
        %v815 = vunpack.c.h.b16 %v438
        %v816 = vunpack.c.l.b16 %v439
        %v817 = vunpack.c.h.b16 %v439
        %v818 = vunpack.c.l.b16 %v440
        %v819 = vunpack.c.h.b16 %v440
        %v820 = vunpack.c.l.b16 %v441
        %v821 = vunpack.c.h.b16 %v441
        %v822 = vunpack.c.l.b16 %v442
        %v823 = vunpack.c.h.b16 %v442
        %v824 = vunpack.c.l.b16 %v443
        %v825 = vunpack.c.h.b16 %v443
        %v826 = vunpack.c.l.b16 %v444
        %v827 = vunpack.c.h.b16 %v444
        %v828 = vunpack.c.l.b16 %v445
        %v829 = vunpack.c.h.b16 %v445
        %v830 = vunpack.c.l.b16 %v446
        %v831 = vunpack.c.h.b16 %v446
        %v832 = vunpack.c.l.b16 %v447
        %v833 = vunpack.c.h.b16 %v447
        %v834 = vunpack.c.l.b16 %v448
        %v835 = vunpack.c.h.b16 %v448
        %v836 = vunpack.c.l.b16 %v449
        %v837 = vunpack.c.h.b16 %v449
        %v838 = vunpack.c.l.b16 %v450
        %v839 = vunpack.c.h.b16 %v450
        %v840 = vunpack.c.l.b16 %v451
        %v841 = vunpack.c.h.b16 %v451
        %v842 = vunpack.c.l.b16 %v452
        %v843 = vunpack.c.h.b16 %v452
        %v844 = vpack.c.b16 %v782, %v780
        %v845 = vpack.c.b16 %v783, %v781
        %v846 = vpack.c.b16 %v786, %v784
        %v847 = vpack.c.b16 %v787, %v785
        %v848 = vpack.c.b16 %v790, %v788
        %v849 = vpack.c.b16 %v791, %v789
        %v850 = vpack.c.b16 %v794, %v792
        %v851 = vpack.c.b16 %v795, %v793
        %v852 = vpack.c.b16 %v798, %v796
        %v853 = vpack.c.b16 %v799, %v797
        %v854 = vpack.c.b16 %v802, %v800
        %v855 = vpack.c.b16 %v803, %v801
        %v856 = vpack.c.b16 %v806, %v804
        %v857 = vpack.c.b16 %v807, %v805
        %v858 = vpack.c.b16 %v810, %v808
        %v859 = vpack.c.b16 %v811, %v809
        %v860 = vpack.c.b16 %v814, %v812
        %v861 = vpack.c.b16 %v815, %v813
        %v862 = vpack.c.b16 %v818, %v816
        %v863 = vpack.c.b16 %v819, %v817
        %v864 = vpack.c.b16 %v822, %v820
        %v865 = vpack.c.b16 %v823, %v821
        %v866 = vpack.c.b16 %v826, %v824
        %v867 = vpack.c.b16 %v827, %v825
        %v868 = vpack.c.b16 %v830, %v828
        %v869 = vpack.c.b16 %v831, %v829
        %v870 = vpack.c.b16 %v834, %v832
        %v871 = vpack.c.b16 %v835, %v833
        %v872 = vpack.c.b16 %v838, %v836
        %v873 = vpack.c.b16 %v839, %v837
        %v874 = vpack.c.b16 %v842, %v840
        %v875 = vpack.c.b16 %v843, %v841
        %908 = vmatpush.bf16.msra.mxu0 %v858
        %909 = vmatpush.bf16.msra.mxu0 %v856
        %910 = vmatpush.bf16.msra.mxu0 %v854
        %911 = vmatpush.bf16.msra.mxu0 %v852
        %912 = vmatpush.bf16.msra.mxu0 %v850
        %913 = vmatpush.bf16.msra.mxu0 %v848
        %914 = vmatpush.bf16.msra.mxu0 %v846
        %915 = vmatpush.bf16.msra.mxu0 %v844
        %916 = vmatmul.bf16.gmra.mxu0 %v746
        %v917 = vpop.f32.mrf.mxu0
        %v918 = vadd.f32 0.0, %v917
        %v919 = vpop.f32.mrf.mxu0
        %v920 = vadd.f32 0.0, %v919
        %921 = vdwg.mxu0
        %922 = vmatpush.bf16.msra.mxu0 %v874
        %923 = vmatpush.bf16.msra.mxu0 %v872
        %924 = vmatpush.bf16.msra.mxu0 %v870
        %925 = vmatpush.bf16.msra.mxu0 %v868
        %926 = vmatpush.bf16.msra.mxu0 %v866
        %927 = vmatpush.bf16.msra.mxu0 %v864
        %928 = vmatpush.bf16.msra.mxu0 %v862
        %929 = vmatpush.bf16.msra.mxu0 %v860
        %930 = vmatmul.bf16.gmra.mxu0 %v747
        %v931 = vpop.f32.mrf.mxu0
        %v932 = vadd.f32 %v918, %v931
        %v933 = vpop.f32.mrf.mxu0
        %v934 = vadd.f32 %v920, %v933
        %935 = vdwg.mxu0
        %936 = vmatpush.bf16.msra.mxu0 %v859
        %937 = vmatpush.bf16.msra.mxu0 %v857
        %938 = vmatpush.bf16.msra.mxu0 %v855
        %939 = vmatpush.bf16.msra.mxu0 %v853
        %940 = vmatpush.bf16.msra.mxu0 %v851
        %941 = vmatpush.bf16.msra.mxu0 %v849
        %942 = vmatpush.bf16.msra.mxu0 %v847
        %943 = vmatpush.bf16.msra.mxu0 %v845
        %944 = vmatmul.bf16.gmra.mxu0 %v746
        %v945 = vpop.f32.mrf.mxu0
        %v946 = vadd.f32 0.0, %v945
        %v947 = vpop.f32.mrf.mxu0
        %v948 = vadd.f32 0.0, %v947
        %949 = vdwg.mxu0
        %950 = vmatpush.bf16.msra.mxu0 %v875
        %951 = vmatpush.bf16.msra.mxu0 %v873
        %952 = vmatpush.bf16.msra.mxu0 %v871
        %953 = vmatpush.bf16.msra.mxu0 %v869
        %954 = vmatpush.bf16.msra.mxu0 %v867
        %955 = vmatpush.bf16.msra.mxu0 %v865
        %956 = vmatpush.bf16.msra.mxu0 %v863
        %957 = vmatpush.bf16.msra.mxu0 %v861
        %958 = vmatmul.bf16.gmra.mxu0 %v747
        %v959 = vpop.f32.mrf.mxu0
        %v960 = vadd.f32 %v946, %v959
        %v961 = vpop.f32.mrf.mxu0
        %v962 = vadd.f32 %v948, %v961
        %963 = vdwg.mxu0
        %v996 = vunpack.c.l.b16 %v454
        %v997 = vunpack.c.h.b16 %v454
        %v998 = vunpack.c.l.b16 %v455
        %v999 = vunpack.c.h.b16 %v455
        %v1000 = vunpack.c.l.b16 %v456
        %v1001 = vunpack.c.h.b16 %v456
        %v1002 = vunpack.c.l.b16 %v457
        %v1003 = vunpack.c.h.b16 %v457
        %v1004 = vunpack.c.l.b16 %v458
        %v1005 = vunpack.c.h.b16 %v458
        %v1006 = vunpack.c.l.b16 %v459
        %v1007 = vunpack.c.h.b16 %v459
        %v1008 = vunpack.c.l.b16 %v460
        %v1009 = vunpack.c.h.b16 %v460
        %v1010 = vunpack.c.l.b16 %v461
        %v1011 = vunpack.c.h.b16 %v461
        %v1012 = vunpack.c.l.b16 %v462
        %v1013 = vunpack.c.h.b16 %v462
        %v1014 = vunpack.c.l.b16 %v463
        %v1015 = vunpack.c.h.b16 %v463
        %v1016 = vunpack.c.l.b16 %v464
        %v1017 = vunpack.c.h.b16 %v464
        %v1018 = vunpack.c.l.b16 %v465
        %v1019 = vunpack.c.h.b16 %v465
        %v1020 = vunpack.c.l.b16 %v466
        %v1021 = vunpack.c.h.b16 %v466
        %v1022 = vunpack.c.l.b16 %v467
        %v1023 = vunpack.c.h.b16 %v467
        %v1024 = vunpack.c.l.b16 %v468
        %v1025 = vunpack.c.h.b16 %v468
        %v1026 = vunpack.c.l.b16 %v469
        %v1027 = vunpack.c.h.b16 %v469
        %v1028 = vunpack.c.l.b16 %v470
        %v1029 = vunpack.c.h.b16 %v470
        %v1030 = vunpack.c.l.b16 %v471
        %v1031 = vunpack.c.h.b16 %v471
        %v1032 = vunpack.c.l.b16 %v472
        %v1033 = vunpack.c.h.b16 %v472
        %v1034 = vunpack.c.l.b16 %v473
        %v1035 = vunpack.c.h.b16 %v473
        %v1036 = vunpack.c.l.b16 %v474
        %v1037 = vunpack.c.h.b16 %v474
        %v1038 = vunpack.c.l.b16 %v475
        %v1039 = vunpack.c.h.b16 %v475
        %v1040 = vunpack.c.l.b16 %v476
        %v1041 = vunpack.c.h.b16 %v476
        %v1042 = vunpack.c.l.b16 %v477
        %v1043 = vunpack.c.h.b16 %v477
        %v1044 = vunpack.c.l.b16 %v478
        %v1045 = vunpack.c.h.b16 %v478
        %v1046 = vunpack.c.l.b16 %v479
        %v1047 = vunpack.c.h.b16 %v479
        %v1048 = vunpack.c.l.b16 %v480
        %v1049 = vunpack.c.h.b16 %v480
        %v1050 = vunpack.c.l.b16 %v481
        %v1051 = vunpack.c.h.b16 %v481
        %v1052 = vunpack.c.l.b16 %v482
        %v1053 = vunpack.c.h.b16 %v482
        %v1054 = vunpack.c.l.b16 %v483
        %v1055 = vunpack.c.h.b16 %v483
        %v1056 = vunpack.c.l.b16 %v484
        %v1057 = vunpack.c.h.b16 %v484
        %v1058 = vunpack.c.l.b16 %v485
        %v1059 = vunpack.c.h.b16 %v485
        %v1060 = vpack.c.b16 %v998, %v996
        %v1061 = vpack.c.b16 %v999, %v997
        %v1062 = vpack.c.b16 %v1002, %v1000
        %v1063 = vpack.c.b16 %v1003, %v1001
        %v1064 = vpack.c.b16 %v1006, %v1004
        %v1065 = vpack.c.b16 %v1007, %v1005
        %v1066 = vpack.c.b16 %v1010, %v1008
        %v1067 = vpack.c.b16 %v1011, %v1009
        %v1068 = vpack.c.b16 %v1014, %v1012
        %v1069 = vpack.c.b16 %v1015, %v1013
        %v1070 = vpack.c.b16 %v1018, %v1016
        %v1071 = vpack.c.b16 %v1019, %v1017
        %v1072 = vpack.c.b16 %v1022, %v1020
        %v1073 = vpack.c.b16 %v1023, %v1021
        %v1074 = vpack.c.b16 %v1026, %v1024
        %v1075 = vpack.c.b16 %v1027, %v1025
        %v1076 = vpack.c.b16 %v1030, %v1028
        %v1077 = vpack.c.b16 %v1031, %v1029
        %v1078 = vpack.c.b16 %v1034, %v1032
        %v1079 = vpack.c.b16 %v1035, %v1033
        %v1080 = vpack.c.b16 %v1038, %v1036
        %v1081 = vpack.c.b16 %v1039, %v1037
        %v1082 = vpack.c.b16 %v1042, %v1040
        %v1083 = vpack.c.b16 %v1043, %v1041
        %v1084 = vpack.c.b16 %v1046, %v1044
        %v1085 = vpack.c.b16 %v1047, %v1045
        %v1086 = vpack.c.b16 %v1050, %v1048
        %v1087 = vpack.c.b16 %v1051, %v1049
        %v1088 = vpack.c.b16 %v1054, %v1052
        %v1089 = vpack.c.b16 %v1055, %v1053
        %v1090 = vpack.c.b16 %v1058, %v1056
        %v1091 = vpack.c.b16 %v1059, %v1057
        %1124 = vmatpush.bf16.msra.mxu0 %v1074
        %1125 = vmatpush.bf16.msra.mxu0 %v1072
        %1126 = vmatpush.bf16.msra.mxu0 %v1070
        %1127 = vmatpush.bf16.msra.mxu0 %v1068
        %1128 = vmatpush.bf16.msra.mxu0 %v1066
        %1129 = vmatpush.bf16.msra.mxu0 %v1064
        %1130 = vmatpush.bf16.msra.mxu0 %v1062
        %1131 = vmatpush.bf16.msra.mxu0 %v1060
        %1132 = vmatmul.bf16.gmra.mxu0 %v746
        %v1133 = vpop.f32.mrf.mxu0
        %v1134 = vadd.f32 0.0, %v1133
        %v1135 = vpop.f32.mrf.mxu0
        %v1136 = vadd.f32 0.0, %v1135
        %1137 = vdwg.mxu0
        %1138 = vmatpush.bf16.msra.mxu0 %v1090
        %1139 = vmatpush.bf16.msra.mxu0 %v1088
        %1140 = vmatpush.bf16.msra.mxu0 %v1086
        %1141 = vmatpush.bf16.msra.mxu0 %v1084
        %1142 = vmatpush.bf16.msra.mxu0 %v1082
        %1143 = vmatpush.bf16.msra.mxu0 %v1080
        %1144 = vmatpush.bf16.msra.mxu0 %v1078
        %1145 = vmatpush.bf16.msra.mxu0 %v1076
        %1146 = vmatmul.bf16.gmra.mxu0 %v747
        %v1147 = vpop.f32.mrf.mxu0
        %v1148 = vadd.f32 %v1134, %v1147
        %v1149 = vpop.f32.mrf.mxu0
        %v1150 = vadd.f32 %v1136, %v1149
        %1151 = vdwg.mxu0
        %1152 = vmatpush.bf16.msra.mxu0 %v1075
        %1153 = vmatpush.bf16.msra.mxu0 %v1073
        %1154 = vmatpush.bf16.msra.mxu0 %v1071
        %1155 = vmatpush.bf16.msra.mxu0 %v1069
        %1156 = vmatpush.bf16.msra.mxu0 %v1067
        %1157 = vmatpush.bf16.msra.mxu0 %v1065
        %1158 = vmatpush.bf16.msra.mxu0 %v1063
        %1159 = vmatpush.bf16.msra.mxu0 %v1061
        %1160 = vmatmul.bf16.gmra.mxu0 %v746
        %v1161 = vpop.f32.mrf.mxu0
        %v1162 = vadd.f32 0.0, %v1161
        %v1163 = vpop.f32.mrf.mxu0
        %v1164 = vadd.f32 0.0, %v1163
        %1165 = vdwg.mxu0
        %1166 = vmatpush.bf16.msra.mxu0 %v1091
        %1167 = vmatpush.bf16.msra.mxu0 %v1089
        %1168 = vmatpush.bf16.msra.mxu0 %v1087
        %1169 = vmatpush.bf16.msra.mxu0 %v1085
        %1170 = vmatpush.bf16.msra.mxu0 %v1083
        %1171 = vmatpush.bf16.msra.mxu0 %v1081
        %1172 = vmatpush.bf16.msra.mxu0 %v1079
        %1173 = vmatpush.bf16.msra.mxu0 %v1077
        %1174 = vmatmul.bf16.gmra.mxu0 %v747
        %v1175 = vpop.f32.mrf.mxu0
        %v1176 = vadd.f32 %v1162, %v1175
        %v1177 = vpop.f32.mrf.mxu0
        %v1178 = vadd.f32 %v1164, %v1177
        %1179 = vdwg.mxu0
        %v1212 = vunpack.c.l.b16 %v487
        %v1213 = vunpack.c.h.b16 %v487
        %v1214 = vunpack.c.l.b16 %v488
        %v1215 = vunpack.c.h.b16 %v488
        %v1216 = vunpack.c.l.b16 %v489
        %v1217 = vunpack.c.h.b16 %v489
        %v1218 = vunpack.c.l.b16 %v490
        %v1219 = vunpack.c.h.b16 %v490
        %v1220 = vunpack.c.l.b16 %v491
        %v1221 = vunpack.c.h.b16 %v491
        %v1222 = vunpack.c.l.b16 %v492
        %v1223 = vunpack.c.h.b16 %v492
        %v1224 = vunpack.c.l.b16 %v493
        %v1225 = vunpack.c.h.b16 %v493
        %v1226 = vunpack.c.l.b16 %v494
        %v1227 = vunpack.c.h.b16 %v494
        %v1228 = vunpack.c.l.b16 %v495
        %v1229 = vunpack.c.h.b16 %v495
        %v1230 = vunpack.c.l.b16 %v496
        %v1231 = vunpack.c.h.b16 %v496
        %v1232 = vunpack.c.l.b16 %v497
        %v1233 = vunpack.c.h.b16 %v497
        %v1234 = vunpack.c.l.b16 %v498
        %v1235 = vunpack.c.h.b16 %v498
        %v1236 = vunpack.c.l.b16 %v499
        %v1237 = vunpack.c.h.b16 %v499
        %v1238 = vunpack.c.l.b16 %v500
        %v1239 = vunpack.c.h.b16 %v500
        %v1240 = vunpack.c.l.b16 %v501
        %v1241 = vunpack.c.h.b16 %v501
        %v1242 = vunpack.c.l.b16 %v502
        %v1243 = vunpack.c.h.b16 %v502
        %v1244 = vunpack.c.l.b16 %v503
        %v1245 = vunpack.c.h.b16 %v503
        %v1246 = vunpack.c.l.b16 %v504
        %v1247 = vunpack.c.h.b16 %v504
        %v1248 = vunpack.c.l.b16 %v505
        %v1249 = vunpack.c.h.b16 %v505
        %v1250 = vunpack.c.l.b16 %v506
        %v1251 = vunpack.c.h.b16 %v506
        %v1252 = vunpack.c.l.b16 %v507
        %v1253 = vunpack.c.h.b16 %v507
        %v1254 = vunpack.c.l.b16 %v508
        %v1255 = vunpack.c.h.b16 %v508
        %v1256 = vunpack.c.l.b16 %v509
        %v1257 = vunpack.c.h.b16 %v509
        %v1258 = vunpack.c.l.b16 %v510
        %v1259 = vunpack.c.h.b16 %v510
        %v1260 = vunpack.c.l.b16 %v511
        %v1261 = vunpack.c.h.b16 %v511
        %v1262 = vunpack.c.l.b16 %v512
        %v1263 = vunpack.c.h.b16 %v512
        %v1264 = vunpack.c.l.b16 %v513
        %v1265 = vunpack.c.h.b16 %v513
        %v1266 = vunpack.c.l.b16 %v514
        %v1267 = vunpack.c.h.b16 %v514
        %v1268 = vunpack.c.l.b16 %v515
        %v1269 = vunpack.c.h.b16 %v515
        %v1270 = vunpack.c.l.b16 %v516
        %v1271 = vunpack.c.h.b16 %v516
        %v1272 = vunpack.c.l.b16 %v517
        %v1273 = vunpack.c.h.b16 %v517
        %v1274 = vunpack.c.l.b16 %v518
        %v1275 = vunpack.c.h.b16 %v518
        %v1276 = vpack.c.b16 %v1214, %v1212
        %v1277 = vpack.c.b16 %v1215, %v1213
        %v1278 = vpack.c.b16 %v1218, %v1216
        %v1279 = vpack.c.b16 %v1219, %v1217
        %v1280 = vpack.c.b16 %v1222, %v1220
        %v1281 = vpack.c.b16 %v1223, %v1221
        %v1282 = vpack.c.b16 %v1226, %v1224
        %v1283 = vpack.c.b16 %v1227, %v1225
        %v1284 = vpack.c.b16 %v1230, %v1228
        %v1285 = vpack.c.b16 %v1231, %v1229
        %v1286 = vpack.c.b16 %v1234, %v1232
        %v1287 = vpack.c.b16 %v1235, %v1233
        %v1288 = vpack.c.b16 %v1238, %v1236
        %v1289 = vpack.c.b16 %v1239, %v1237
        %v1290 = vpack.c.b16 %v1242, %v1240
        %v1291 = vpack.c.b16 %v1243, %v1241
        %v1292 = vpack.c.b16 %v1246, %v1244
        %v1293 = vpack.c.b16 %v1247, %v1245
        %v1294 = vpack.c.b16 %v1250, %v1248
        %v1295 = vpack.c.b16 %v1251, %v1249
        %v1296 = vpack.c.b16 %v1254, %v1252
        %v1297 = vpack.c.b16 %v1255, %v1253
        %v1298 = vpack.c.b16 %v1258, %v1256
        %v1299 = vpack.c.b16 %v1259, %v1257
        %v1300 = vpack.c.b16 %v1262, %v1260
        %v1301 = vpack.c.b16 %v1263, %v1261
        %v1302 = vpack.c.b16 %v1266, %v1264
        %v1303 = vpack.c.b16 %v1267, %v1265
        %v1304 = vpack.c.b16 %v1270, %v1268
        %v1305 = vpack.c.b16 %v1271, %v1269
        %v1306 = vpack.c.b16 %v1274, %v1272
        %v1307 = vpack.c.b16 %v1275, %v1273
        %1340 = vmatpush.bf16.msra.mxu0 %v1290
        %1341 = vmatpush.bf16.msra.mxu0 %v1288
        %1342 = vmatpush.bf16.msra.mxu0 %v1286
        %1343 = vmatpush.bf16.msra.mxu0 %v1284
        %1344 = vmatpush.bf16.msra.mxu0 %v1282
        %1345 = vmatpush.bf16.msra.mxu0 %v1280
        %1346 = vmatpush.bf16.msra.mxu0 %v1278
        %1347 = vmatpush.bf16.msra.mxu0 %v1276
        %1348 = vmatmul.bf16.gmra.mxu0 %v746
        %v1349 = vpop.f32.mrf.mxu0
        %v1350 = vadd.f32 0.0, %v1349
        %v1351 = vpop.f32.mrf.mxu0
        %v1352 = vadd.f32 0.0, %v1351
        %1353 = vdwg.mxu0
        %1354 = vmatpush.bf16.msra.mxu0 %v1306
        %1355 = vmatpush.bf16.msra.mxu0 %v1304
        %1356 = vmatpush.bf16.msra.mxu0 %v1302
        %1357 = vmatpush.bf16.msra.mxu0 %v1300
        %1358 = vmatpush.bf16.msra.mxu0 %v1298
        %1359 = vmatpush.bf16.msra.mxu0 %v1296
        %1360 = vmatpush.bf16.msra.mxu0 %v1294
        %1361 = vmatpush.bf16.msra.mxu0 %v1292
        %1362 = vmatmul.bf16.gmra.mxu0 %v747
        %v1363 = vpop.f32.mrf.mxu0
        %v1364 = vadd.f32 %v1350, %v1363
        %v1365 = vpop.f32.mrf.mxu0
        %v1366 = vadd.f32 %v1352, %v1365
        %1367 = vdwg.mxu0
        %1368 = vmatpush.bf16.msra.mxu0 %v1291
        %1369 = vmatpush.bf16.msra.mxu0 %v1289
        %1370 = vmatpush.bf16.msra.mxu0 %v1287
        %1371 = vmatpush.bf16.msra.mxu0 %v1285
        %1372 = vmatpush.bf16.msra.mxu0 %v1283
        %1373 = vmatpush.bf16.msra.mxu0 %v1281
        %1374 = vmatpush.bf16.msra.mxu0 %v1279
        %1375 = vmatpush.bf16.msra.mxu0 %v1277
        %1376 = vmatmul.bf16.gmra.mxu0 %v746
        %v1377 = vpop.f32.mrf.mxu0
        %v1378 = vadd.f32 0.0, %v1377
        %v1379 = vpop.f32.mrf.mxu0
        %v1380 = vadd.f32 0.0, %v1379
        %1381 = vdwg.mxu0
        %1382 = vmatpush.bf16.msra.mxu0 %v1307
        %1383 = vmatpush.bf16.msra.mxu0 %v1305
        %1384 = vmatpush.bf16.msra.mxu0 %v1303
        %1385 = vmatpush.bf16.msra.mxu0 %v1301
        %1386 = vmatpush.bf16.msra.mxu0 %v1299
        %1387 = vmatpush.bf16.msra.mxu0 %v1297
        %1388 = vmatpush.bf16.msra.mxu0 %v1295
        %1389 = vmatpush.bf16.msra.mxu0 %v1293
        %1390 = vmatmul.bf16.gmra.mxu0 %v747
        %v1391 = vpop.f32.mrf.mxu0
        %v1392 = vadd.f32 %v1378, %v1391
        %v1393 = vpop.f32.mrf.mxu0
        %v1394 = vadd.f32 %v1380, %v1393
        %1395 = vdwg.mxu0
        %vm1400 = vcmask 1040384
        %v1401 = vrot.slane %v932, 7
        %v1402 = vrot.slane %v960, 7
        %v1403 = vrot.slane %v934, 7
        %v1404 = vsel %vm1400, %v1401, %v1403
        %v1405 = vrot.slane %v962, 7
        %v1406 = vsel %vm1400, %v1402, %v1405
        %v1411 = vsel %vm1400, 0.0, %v1401
        %v1412 = vsel %vm1400, 0.0, %v1402
        %vm1417 = vcmask 1046528
        %v1418 = vrot.slane %v1364, 1
        %v1419 = vrot.slane %v1366, 1
        %v1420 = vsel %vm1417, %v1418, %v1419
        %v1421 = vrot.slane %v1392, 1
        %v1422 = vrot.slane %v1394, 1
        %v1423 = vsel %vm1417, %v1421, %v1422
        %v1428 = vsel %vm1417, %v1419, 0.0
        %v1429 = vsel %vm1417, %v1422, 0.0
        %v1430 = vadd.f32 %v1411, %v1148
        %v1431 = vadd.f32 %v1412, %v1176
        %v1432 = vadd.f32 %v1404, %v1150
        %v1433 = vadd.f32 %v1406, %v1178
        %v1434 = vadd.f32 %v1430, %v1420
        %v1435 = vadd.f32 %v1431, %v1423
        %v1436 = vadd.f32 %v1432, %v1428
        %v1437 = vadd.f32 %v1433, %v1429
        %v1439 = vperm.slane %v419, 0
        %v1440 = vperm.slane %v419, 1
        %v1443 = vadd.f32 %v1434, %v1439
        %v1444 = vadd.f32 %v1435, %v1440
        %v1445 = vadd.f32 %v1436, %v1439
        %v1446 = vadd.f32 %v1437, %v1440
        %v1447 = vmax.f32 %v1443, 0.0
        %v1448 = vmax.f32 %v1444, 0.0
        %v1449 = vmax.f32 %v1445, 0.0
        %v1450 = vmax.f32 %v1446, 0.0
        %v1451 = vmul.f32 %v1447, %v400
        %v1452 = vmul.f32 %v1448, %v400
        %v1453 = vmul.f32 %v1449, %v401
        %v1454 = vmul.f32 %v1450, %v401
        %v1455 = vpack.c.bf16 %v1453, %v1451
        %v1456 = vpack.c.bf16 %v1454, %v1452
        %v1489 = vunpack.c.l.b16 %v519
        %v1490 = vunpack.c.h.b16 %v519
        %v1491 = vunpack.c.l.b16 %v520
        %v1492 = vunpack.c.h.b16 %v520
        %v1493 = vunpack.c.l.b16 %v521
        %v1494 = vunpack.c.h.b16 %v521
        %v1495 = vunpack.c.l.b16 %v522
        %v1496 = vunpack.c.h.b16 %v522
        %v1497 = vunpack.c.l.b16 %v523
        %v1498 = vunpack.c.h.b16 %v523
        %v1499 = vunpack.c.l.b16 %v524
        %v1500 = vunpack.c.h.b16 %v524
        %v1501 = vunpack.c.l.b16 %v525
        %v1502 = vunpack.c.h.b16 %v525
        %v1503 = vunpack.c.l.b16 %v526
        %v1504 = vunpack.c.h.b16 %v526
        %v1505 = vunpack.c.l.b16 %v527
        %v1506 = vunpack.c.h.b16 %v527
        %v1507 = vunpack.c.l.b16 %v528
        %v1508 = vunpack.c.h.b16 %v528
        %v1509 = vunpack.c.l.b16 %v529
        %v1510 = vunpack.c.h.b16 %v529
        %v1511 = vunpack.c.l.b16 %v530
        %v1512 = vunpack.c.h.b16 %v530
        %v1513 = vunpack.c.l.b16 %v531
        %v1514 = vunpack.c.h.b16 %v531
        %v1515 = vunpack.c.l.b16 %v532
        %v1516 = vunpack.c.h.b16 %v532
        %v1517 = vunpack.c.l.b16 %v533
        %v1518 = vunpack.c.h.b16 %v533
        %v1519 = vunpack.c.l.b16 %v534
        %v1520 = vunpack.c.h.b16 %v534
        %v1521 = vunpack.c.l.b16 %v535
        %v1522 = vunpack.c.h.b16 %v535
        %v1523 = vunpack.c.l.b16 %v536
        %v1524 = vunpack.c.h.b16 %v536
        %v1525 = vunpack.c.l.b16 %v537
        %v1526 = vunpack.c.h.b16 %v537
        %v1527 = vunpack.c.l.b16 %v538
        %v1528 = vunpack.c.h.b16 %v538
        %v1529 = vunpack.c.l.b16 %v539
        %v1530 = vunpack.c.h.b16 %v539
        %v1531 = vunpack.c.l.b16 %v540
        %v1532 = vunpack.c.h.b16 %v540
        %v1533 = vunpack.c.l.b16 %v541
        %v1534 = vunpack.c.h.b16 %v541
        %v1535 = vunpack.c.l.b16 %v542
        %v1536 = vunpack.c.h.b16 %v542
        %v1537 = vunpack.c.l.b16 %v543
        %v1538 = vunpack.c.h.b16 %v543
        %v1539 = vunpack.c.l.b16 %v544
        %v1540 = vunpack.c.h.b16 %v544
        %v1541 = vunpack.c.l.b16 %v545
        %v1542 = vunpack.c.h.b16 %v545
        %v1543 = vunpack.c.l.b16 %v546
        %v1544 = vunpack.c.h.b16 %v546
        %v1545 = vunpack.c.l.b16 %v547
        %v1546 = vunpack.c.h.b16 %v547
        %v1547 = vunpack.c.l.b16 %v548
        %v1548 = vunpack.c.h.b16 %v548
        %v1549 = vunpack.c.l.b16 %v549
        %v1550 = vunpack.c.h.b16 %v549
        %v1551 = vunpack.c.l.b16 %v550
        %v1552 = vunpack.c.h.b16 %v550
        %v1553 = vpack.c.b16 %v1491, %v1489
        %v1554 = vpack.c.b16 %v1492, %v1490
        %v1555 = vpack.c.b16 %v1495, %v1493
        %v1556 = vpack.c.b16 %v1496, %v1494
        %v1557 = vpack.c.b16 %v1499, %v1497
        %v1558 = vpack.c.b16 %v1500, %v1498
        %v1559 = vpack.c.b16 %v1503, %v1501
        %v1560 = vpack.c.b16 %v1504, %v1502
        %v1561 = vpack.c.b16 %v1507, %v1505
        %v1562 = vpack.c.b16 %v1508, %v1506
        %v1563 = vpack.c.b16 %v1511, %v1509
        %v1564 = vpack.c.b16 %v1512, %v1510
        %v1565 = vpack.c.b16 %v1515, %v1513
        %v1566 = vpack.c.b16 %v1516, %v1514
        %v1567 = vpack.c.b16 %v1519, %v1517
        %v1568 = vpack.c.b16 %v1520, %v1518
        %v1569 = vpack.c.b16 %v1523, %v1521
        %v1570 = vpack.c.b16 %v1524, %v1522
        %v1571 = vpack.c.b16 %v1527, %v1525
        %v1572 = vpack.c.b16 %v1528, %v1526
        %v1573 = vpack.c.b16 %v1531, %v1529
        %v1574 = vpack.c.b16 %v1532, %v1530
        %v1575 = vpack.c.b16 %v1535, %v1533
        %v1576 = vpack.c.b16 %v1536, %v1534
        %v1577 = vpack.c.b16 %v1539, %v1537
        %v1578 = vpack.c.b16 %v1540, %v1538
        %v1579 = vpack.c.b16 %v1543, %v1541
        %v1580 = vpack.c.b16 %v1544, %v1542
        %v1581 = vpack.c.b16 %v1547, %v1545
        %v1582 = vpack.c.b16 %v1548, %v1546
        %v1583 = vpack.c.b16 %v1551, %v1549
        %v1584 = vpack.c.b16 %v1552, %v1550
        %1617 = vmatpush.bf16.msra.mxu0 %v1567
        %1618 = vmatpush.bf16.msra.mxu0 %v1565
        %1619 = vmatpush.bf16.msra.mxu0 %v1563
        %1620 = vmatpush.bf16.msra.mxu0 %v1561
        %1621 = vmatpush.bf16.msra.mxu0 %v1559
        %1622 = vmatpush.bf16.msra.mxu0 %v1557
        %1623 = vmatpush.bf16.msra.mxu0 %v1555
        %1624 = vmatpush.bf16.msra.mxu0 %v1553
        %1625 = vmatmul.bf16.gmra.mxu0 %v1455
        %v1626 = vpop.f32.mrf.mxu0
        %v1627 = vadd.f32 0.0, %v1626
        %v1628 = vpop.f32.mrf.mxu0
        %v1629 = vadd.f32 0.0, %v1628
        %1630 = vdwg.mxu0
        %1631 = vmatpush.bf16.msra.mxu0 %v1583
        %1632 = vmatpush.bf16.msra.mxu0 %v1581
        %1633 = vmatpush.bf16.msra.mxu0 %v1579
        %1634 = vmatpush.bf16.msra.mxu0 %v1577
        %1635 = vmatpush.bf16.msra.mxu0 %v1575
        %1636 = vmatpush.bf16.msra.mxu0 %v1573
        %1637 = vmatpush.bf16.msra.mxu0 %v1571
        %1638 = vmatpush.bf16.msra.mxu0 %v1569
        %1639 = vmatmul.bf16.gmra.mxu0 %v1456
        %v1640 = vpop.f32.mrf.mxu0
        %v1641 = vadd.f32 %v1627, %v1640
        %v1642 = vpop.f32.mrf.mxu0
        %v1643 = vadd.f32 %v1629, %v1642
        %1644 = vdwg.mxu0
        %1645 = vmatpush.bf16.msra.mxu0 %v1568
        %1646 = vmatpush.bf16.msra.mxu0 %v1566
        %1647 = vmatpush.bf16.msra.mxu0 %v1564
        %1648 = vmatpush.bf16.msra.mxu0 %v1562
        %1649 = vmatpush.bf16.msra.mxu0 %v1560
        %1650 = vmatpush.bf16.msra.mxu0 %v1558
        %1651 = vmatpush.bf16.msra.mxu0 %v1556
        %1652 = vmatpush.bf16.msra.mxu0 %v1554
        %1653 = vmatmul.bf16.gmra.mxu0 %v1455
        %v1654 = vpop.f32.mrf.mxu0
        %v1655 = vadd.f32 0.0, %v1654
        %v1656 = vpop.f32.mrf.mxu0
        %v1657 = vadd.f32 0.0, %v1656
        %1658 = vdwg.mxu0
        %1659 = vmatpush.bf16.msra.mxu0 %v1584
        %1660 = vmatpush.bf16.msra.mxu0 %v1582
        %1661 = vmatpush.bf16.msra.mxu0 %v1580
        %1662 = vmatpush.bf16.msra.mxu0 %v1578
        %1663 = vmatpush.bf16.msra.mxu0 %v1576
        %1664 = vmatpush.bf16.msra.mxu0 %v1574
        %1665 = vmatpush.bf16.msra.mxu0 %v1572
        %1666 = vmatpush.bf16.msra.mxu0 %v1570
        %1667 = vmatmul.bf16.gmra.mxu0 %v1456
        %v1668 = vpop.f32.mrf.mxu0
        %v1669 = vadd.f32 %v1655, %v1668
        %v1670 = vpop.f32.mrf.mxu0
        %v1671 = vadd.f32 %v1657, %v1670
        %1672 = vdwg.mxu0
        %v1705 = vunpack.c.l.b16 %v552
        %v1706 = vunpack.c.h.b16 %v552
        %v1707 = vunpack.c.l.b16 %v553
        %v1708 = vunpack.c.h.b16 %v553
        %v1709 = vunpack.c.l.b16 %v554
        %v1710 = vunpack.c.h.b16 %v554
        %v1711 = vunpack.c.l.b16 %v555
        %v1712 = vunpack.c.h.b16 %v555
        %v1713 = vunpack.c.l.b16 %v556
        %v1714 = vunpack.c.h.b16 %v556
        %v1715 = vunpack.c.l.b16 %v557
        %v1716 = vunpack.c.h.b16 %v557
        %v1717 = vunpack.c.l.b16 %v558
        %v1718 = vunpack.c.h.b16 %v558
        %v1719 = vunpack.c.l.b16 %v559
        %v1720 = vunpack.c.h.b16 %v559
        %v1721 = vunpack.c.l.b16 %v560
        %v1722 = vunpack.c.h.b16 %v560
        %v1723 = vunpack.c.l.b16 %v561
        %v1724 = vunpack.c.h.b16 %v561
        %v1725 = vunpack.c.l.b16 %v562
        %v1726 = vunpack.c.h.b16 %v562
        %v1727 = vunpack.c.l.b16 %v563
        %v1728 = vunpack.c.h.b16 %v563
        %v1729 = vunpack.c.l.b16 %v564
        %v1730 = vunpack.c.h.b16 %v564
        %v1731 = vunpack.c.l.b16 %v565
        %v1732 = vunpack.c.h.b16 %v565
        %v1733 = vunpack.c.l.b16 %v566
        %v1734 = vunpack.c.h.b16 %v566
        %v1735 = vunpack.c.l.b16 %v567
        %v1736 = vunpack.c.h.b16 %v567
        %v1737 = vunpack.c.l.b16 %v568
        %v1738 = vunpack.c.h.b16 %v568
        %v1739 = vunpack.c.l.b16 %v569
        %v1740 = vunpack.c.h.b16 %v569
        %v1741 = vunpack.c.l.b16 %v570
        %v1742 = vunpack.c.h.b16 %v570
        %v1743 = vunpack.c.l.b16 %v571
        %v1744 = vunpack.c.h.b16 %v571
        %v1745 = vunpack.c.l.b16 %v572
        %v1746 = vunpack.c.h.b16 %v572
        %v1747 = vunpack.c.l.b16 %v573
        %v1748 = vunpack.c.h.b16 %v573
        %v1749 = vunpack.c.l.b16 %v574
        %v1750 = vunpack.c.h.b16 %v574
        %v1751 = vunpack.c.l.b16 %v575
        %v1752 = vunpack.c.h.b16 %v575
        %v1753 = vunpack.c.l.b16 %v576
        %v1754 = vunpack.c.h.b16 %v576
        %v1755 = vunpack.c.l.b16 %v577
        %v1756 = vunpack.c.h.b16 %v577
        %v1757 = vunpack.c.l.b16 %v578
        %v1758 = vunpack.c.h.b16 %v578
        %v1759 = vunpack.c.l.b16 %v579
        %v1760 = vunpack.c.h.b16 %v579
        %v1761 = vunpack.c.l.b16 %v580
        %v1762 = vunpack.c.h.b16 %v580
        %v1763 = vunpack.c.l.b16 %v581
        %v1764 = vunpack.c.h.b16 %v581
        %v1765 = vunpack.c.l.b16 %v582
        %v1766 = vunpack.c.h.b16 %v582
        %v1767 = vunpack.c.l.b16 %v583
        %v1768 = vunpack.c.h.b16 %v583
        %v1769 = vpack.c.b16 %v1707, %v1705
        %v1770 = vpack.c.b16 %v1708, %v1706
        %v1771 = vpack.c.b16 %v1711, %v1709
        %v1772 = vpack.c.b16 %v1712, %v1710
        %v1773 = vpack.c.b16 %v1715, %v1713
        %v1774 = vpack.c.b16 %v1716, %v1714
        %v1775 = vpack.c.b16 %v1719, %v1717
        %v1776 = vpack.c.b16 %v1720, %v1718
        %v1777 = vpack.c.b16 %v1723, %v1721
        %v1778 = vpack.c.b16 %v1724, %v1722
        %v1779 = vpack.c.b16 %v1727, %v1725
        %v1780 = vpack.c.b16 %v1728, %v1726
        %v1781 = vpack.c.b16 %v1731, %v1729
        %v1782 = vpack.c.b16 %v1732, %v1730
        %v1783 = vpack.c.b16 %v1735, %v1733
        %v1784 = vpack.c.b16 %v1736, %v1734
        %v1785 = vpack.c.b16 %v1739, %v1737
        %v1786 = vpack.c.b16 %v1740, %v1738
        %v1787 = vpack.c.b16 %v1743, %v1741
        %v1788 = vpack.c.b16 %v1744, %v1742
        %v1789 = vpack.c.b16 %v1747, %v1745
        %v1790 = vpack.c.b16 %v1748, %v1746
        %v1791 = vpack.c.b16 %v1751, %v1749
        %v1792 = vpack.c.b16 %v1752, %v1750
        %v1793 = vpack.c.b16 %v1755, %v1753
        %v1794 = vpack.c.b16 %v1756, %v1754
        %v1795 = vpack.c.b16 %v1759, %v1757
        %v1796 = vpack.c.b16 %v1760, %v1758
        %v1797 = vpack.c.b16 %v1763, %v1761
        %v1798 = vpack.c.b16 %v1764, %v1762
        %v1799 = vpack.c.b16 %v1767, %v1765
        %v1800 = vpack.c.b16 %v1768, %v1766
        %1833 = vmatpush.bf16.msra.mxu0 %v1783
        %1834 = vmatpush.bf16.msra.mxu0 %v1781
        %1835 = vmatpush.bf16.msra.mxu0 %v1779
        %1836 = vmatpush.bf16.msra.mxu0 %v1777
        %1837 = vmatpush.bf16.msra.mxu0 %v1775
        %1838 = vmatpush.bf16.msra.mxu0 %v1773
        %1839 = vmatpush.bf16.msra.mxu0 %v1771
        %1840 = vmatpush.bf16.msra.mxu0 %v1769
        %1841 = vmatmul.bf16.gmra.mxu0 %v1455
        %v1842 = vpop.f32.mrf.mxu0
        %v1843 = vadd.f32 0.0, %v1842
        %v1844 = vpop.f32.mrf.mxu0
        %v1845 = vadd.f32 0.0, %v1844
        %1846 = vdwg.mxu0
        %1847 = vmatpush.bf16.msra.mxu0 %v1799
        %1848 = vmatpush.bf16.msra.mxu0 %v1797
        %1849 = vmatpush.bf16.msra.mxu0 %v1795
        %1850 = vmatpush.bf16.msra.mxu0 %v1793
        %1851 = vmatpush.bf16.msra.mxu0 %v1791
        %1852 = vmatpush.bf16.msra.mxu0 %v1789
        %1853 = vmatpush.bf16.msra.mxu0 %v1787
        %1854 = vmatpush.bf16.msra.mxu0 %v1785
        %1855 = vmatmul.bf16.gmra.mxu0 %v1456
        %v1856 = vpop.f32.mrf.mxu0
        %v1857 = vadd.f32 %v1843, %v1856
        %v1858 = vpop.f32.mrf.mxu0
        %v1859 = vadd.f32 %v1845, %v1858
        %1860 = vdwg.mxu0
        %1861 = vmatpush.bf16.msra.mxu0 %v1784
        %1862 = vmatpush.bf16.msra.mxu0 %v1782
        %1863 = vmatpush.bf16.msra.mxu0 %v1780
        %1864 = vmatpush.bf16.msra.mxu0 %v1778
        %1865 = vmatpush.bf16.msra.mxu0 %v1776
        %1866 = vmatpush.bf16.msra.mxu0 %v1774
        %1867 = vmatpush.bf16.msra.mxu0 %v1772
        %1868 = vmatpush.bf16.msra.mxu0 %v1770
        %1869 = vmatmul.bf16.gmra.mxu0 %v1455
        %v1870 = vpop.f32.mrf.mxu0
        %v1871 = vadd.f32 0.0, %v1870
        %v1872 = vpop.f32.mrf.mxu0
        %v1873 = vadd.f32 0.0, %v1872
        %1874 = vdwg.mxu0
        %1875 = vmatpush.bf16.msra.mxu0 %v1800
        %1876 = vmatpush.bf16.msra.mxu0 %v1798
        %1877 = vmatpush.bf16.msra.mxu0 %v1796
        %1878 = vmatpush.bf16.msra.mxu0 %v1794
        %1879 = vmatpush.bf16.msra.mxu0 %v1792
        %1880 = vmatpush.bf16.msra.mxu0 %v1790
        %1881 = vmatpush.bf16.msra.mxu0 %v1788
        %1882 = vmatpush.bf16.msra.mxu0 %v1786
        %1883 = vmatmul.bf16.gmra.mxu0 %v1456
        %v1884 = vpop.f32.mrf.mxu0
        %v1885 = vadd.f32 %v1871, %v1884
        %v1886 = vpop.f32.mrf.mxu0
        %v1887 = vadd.f32 %v1873, %v1886
        %1888 = vdwg.mxu0
        %v1921 = vunpack.c.l.b16 %v585
        %v1922 = vunpack.c.h.b16 %v585
        %v1923 = vunpack.c.l.b16 %v586
        %v1924 = vunpack.c.h.b16 %v586
        %v1925 = vunpack.c.l.b16 %v587
        %v1926 = vunpack.c.h.b16 %v587
        %v1927 = vunpack.c.l.b16 %v588
        %v1928 = vunpack.c.h.b16 %v588
        %v1929 = vunpack.c.l.b16 %v589
        %v1930 = vunpack.c.h.b16 %v589
        %v1931 = vunpack.c.l.b16 %v590
        %v1932 = vunpack.c.h.b16 %v590
        %v1933 = vunpack.c.l.b16 %v591
        %v1934 = vunpack.c.h.b16 %v591
        %v1935 = vunpack.c.l.b16 %v592
        %v1936 = vunpack.c.h.b16 %v592
        %v1937 = vunpack.c.l.b16 %v593
        %v1938 = vunpack.c.h.b16 %v593
        %v1939 = vunpack.c.l.b16 %v594
        %v1940 = vunpack.c.h.b16 %v594
        %v1941 = vunpack.c.l.b16 %v595
        %v1942 = vunpack.c.h.b16 %v595
        %v1943 = vunpack.c.l.b16 %v596
        %v1944 = vunpack.c.h.b16 %v596
        %v1945 = vunpack.c.l.b16 %v597
        %v1946 = vunpack.c.h.b16 %v597
        %v1947 = vunpack.c.l.b16 %v598
        %v1948 = vunpack.c.h.b16 %v598
        %v1949 = vunpack.c.l.b16 %v599
        %v1950 = vunpack.c.h.b16 %v599
        %v1951 = vunpack.c.l.b16 %v600
        %v1952 = vunpack.c.h.b16 %v600
        %v1953 = vunpack.c.l.b16 %v601
        %v1954 = vunpack.c.h.b16 %v601
        %v1955 = vunpack.c.l.b16 %v602
        %v1956 = vunpack.c.h.b16 %v602
        %v1957 = vunpack.c.l.b16 %v603
        %v1958 = vunpack.c.h.b16 %v603
        %v1959 = vunpack.c.l.b16 %v604
        %v1960 = vunpack.c.h.b16 %v604
        %v1961 = vunpack.c.l.b16 %v605
        %v1962 = vunpack.c.h.b16 %v605
        %v1963 = vunpack.c.l.b16 %v606
        %v1964 = vunpack.c.h.b16 %v606
        %v1965 = vunpack.c.l.b16 %v607
        %v1966 = vunpack.c.h.b16 %v607
        %v1967 = vunpack.c.l.b16 %v608
        %v1968 = vunpack.c.h.b16 %v608
        %v1969 = vunpack.c.l.b16 %v609
        %v1970 = vunpack.c.h.b16 %v609
        %v1971 = vunpack.c.l.b16 %v610
        %v1972 = vunpack.c.h.b16 %v610
        %v1973 = vunpack.c.l.b16 %v611
        %v1974 = vunpack.c.h.b16 %v611
        %v1975 = vunpack.c.l.b16 %v612
        %v1976 = vunpack.c.h.b16 %v612
        %v1977 = vunpack.c.l.b16 %v613
        %v1978 = vunpack.c.h.b16 %v613
        %v1979 = vunpack.c.l.b16 %v614
        %v1980 = vunpack.c.h.b16 %v614
        %v1981 = vunpack.c.l.b16 %v615
        %v1982 = vunpack.c.h.b16 %v615
        %v1983 = vunpack.c.l.b16 %v616
        %v1984 = vunpack.c.h.b16 %v616
        %v1985 = vpack.c.b16 %v1923, %v1921
        %v1986 = vpack.c.b16 %v1924, %v1922
        %v1987 = vpack.c.b16 %v1927, %v1925
        %v1988 = vpack.c.b16 %v1928, %v1926
        %v1989 = vpack.c.b16 %v1931, %v1929
        %v1990 = vpack.c.b16 %v1932, %v1930
        %v1991 = vpack.c.b16 %v1935, %v1933
        %v1992 = vpack.c.b16 %v1936, %v1934
        %v1993 = vpack.c.b16 %v1939, %v1937
        %v1994 = vpack.c.b16 %v1940, %v1938
        %v1995 = vpack.c.b16 %v1943, %v1941
        %v1996 = vpack.c.b16 %v1944, %v1942
        %v1997 = vpack.c.b16 %v1947, %v1945
        %v1998 = vpack.c.b16 %v1948, %v1946
        %v1999 = vpack.c.b16 %v1951, %v1949
        %v2000 = vpack.c.b16 %v1952, %v1950
        %v2001 = vpack.c.b16 %v1955, %v1953
        %v2002 = vpack.c.b16 %v1956, %v1954
        %v2003 = vpack.c.b16 %v1959, %v1957
        %v2004 = vpack.c.b16 %v1960, %v1958
        %v2005 = vpack.c.b16 %v1963, %v1961
        %v2006 = vpack.c.b16 %v1964, %v1962
        %v2007 = vpack.c.b16 %v1967, %v1965
        %v2008 = vpack.c.b16 %v1968, %v1966
        %v2009 = vpack.c.b16 %v1971, %v1969
        %v2010 = vpack.c.b16 %v1972, %v1970
        %v2011 = vpack.c.b16 %v1975, %v1973
        %v2012 = vpack.c.b16 %v1976, %v1974
        %v2013 = vpack.c.b16 %v1979, %v1977
        %v2014 = vpack.c.b16 %v1980, %v1978
        %v2015 = vpack.c.b16 %v1983, %v1981
        %v2016 = vpack.c.b16 %v1984, %v1982
        %2049 = vmatpush.bf16.msra.mxu0 %v1999
        %2050 = vmatpush.bf16.msra.mxu0 %v1997
        %2051 = vmatpush.bf16.msra.mxu0 %v1995
        %2052 = vmatpush.bf16.msra.mxu0 %v1993
        %2053 = vmatpush.bf16.msra.mxu0 %v1991
        %2054 = vmatpush.bf16.msra.mxu0 %v1989
        %2055 = vmatpush.bf16.msra.mxu0 %v1987
        %2056 = vmatpush.bf16.msra.mxu0 %v1985
        %2057 = vmatmul.bf16.gmra.mxu0 %v1455
        %v2058 = vpop.f32.mrf.mxu0
        %v2059 = vadd.f32 0.0, %v2058
        %v2060 = vpop.f32.mrf.mxu0
        %v2061 = vadd.f32 0.0, %v2060
        %2062 = vdwg.mxu0
        %2063 = vmatpush.bf16.msra.mxu0 %v2015
        %2064 = vmatpush.bf16.msra.mxu0 %v2013
        %2065 = vmatpush.bf16.msra.mxu0 %v2011
        %2066 = vmatpush.bf16.msra.mxu0 %v2009
        %2067 = vmatpush.bf16.msra.mxu0 %v2007
        %2068 = vmatpush.bf16.msra.mxu0 %v2005
        %2069 = vmatpush.bf16.msra.mxu0 %v2003
        %2070 = vmatpush.bf16.msra.mxu0 %v2001
        %2071 = vmatmul.bf16.gmra.mxu0 %v1456
        %v2072 = vpop.f32.mrf.mxu0
        %v2073 = vadd.f32 %v2059, %v2072
        %v2074 = vpop.f32.mrf.mxu0
        %v2075 = vadd.f32 %v2061, %v2074
        %2076 = vdwg.mxu0
        %2077 = vmatpush.bf16.msra.mxu0 %v2000
        %2078 = vmatpush.bf16.msra.mxu0 %v1998
        %2079 = vmatpush.bf16.msra.mxu0 %v1996
        %2080 = vmatpush.bf16.msra.mxu0 %v1994
        %2081 = vmatpush.bf16.msra.mxu0 %v1992
        %2082 = vmatpush.bf16.msra.mxu0 %v1990
        %2083 = vmatpush.bf16.msra.mxu0 %v1988
        %2084 = vmatpush.bf16.msra.mxu0 %v1986
        %2085 = vmatmul.bf16.gmra.mxu0 %v1455
        %v2086 = vpop.f32.mrf.mxu0
        %v2087 = vadd.f32 0.0, %v2086
        %v2088 = vpop.f32.mrf.mxu0
        %v2089 = vadd.f32 0.0, %v2088
        %2090 = vdwg.mxu0
        %2091 = vmatpush.bf16.msra.mxu0 %v2016
        %2092 = vmatpush.bf16.msra.mxu0 %v2014
        %2093 = vmatpush.bf16.msra.mxu0 %v2012
        %2094 = vmatpush.bf16.msra.mxu0 %v2010
        %2095 = vmatpush.bf16.msra.mxu0 %v2008
        %2096 = vmatpush.bf16.msra.mxu0 %v2006
        %2097 = vmatpush.bf16.msra.mxu0 %v2004
        %2098 = vmatpush.bf16.msra.mxu0 %v2002
        %2099 = vmatmul.bf16.gmra.mxu0 %v1456
        %v2100 = vpop.f32.mrf.mxu0
        %v2101 = vadd.f32 %v2087, %v2100
        %v2102 = vpop.f32.mrf.mxu0
        %v2103 = vadd.f32 %v2089, %v2102
        %2104 = vdwg.mxu0
        %v2109 = vrot.slane %v1641, 7
        %v2110 = vrot.slane %v1669, 7
        %v2111 = vrot.slane %v1643, 7
        %v2112 = vsel %vm1400, %v2109, %v2111
        %v2113 = vrot.slane %v1671, 7
        %v2114 = vsel %vm1400, %v2110, %v2113
        %v2119 = vsel %vm1400, 0.0, %v2109
        %v2120 = vsel %vm1400, 0.0, %v2110
        %v2125 = vrot.slane %v2073, 1
        %v2126 = vrot.slane %v2075, 1
        %v2127 = vsel %vm1417, %v2125, %v2126
        %v2128 = vrot.slane %v2101, 1
        %v2129 = vrot.slane %v2103, 1
        %v2130 = vsel %vm1417, %v2128, %v2129
        %v2135 = vsel %vm1417, %v2126, 0.0
        %v2136 = vsel %vm1417, %v2129, 0.0
        %v2137 = vadd.f32 %v2119, %v1857
        %v2138 = vadd.f32 %v2120, %v1885
        %v2139 = vadd.f32 %v2112, %v1859
        %v2140 = vadd.f32 %v2114, %v1887
        %v2141 = vadd.f32 %v2137, %v2127
        %v2142 = vadd.f32 %v2138, %v2130
        %v2143 = vadd.f32 %v2139, %v2135
        %v2144 = vadd.f32 %v2140, %v2136
        %v2146 = vperm.slane %v420, 0
        %v2147 = vperm.slane %v420, 1
        %v2150 = vadd.f32 %v2141, %v2146
        %v2151 = vadd.f32 %v2142, %v2147
        %v2152 = vadd.f32 %v2143, %v2146
        %v2153 = vadd.f32 %v2144, %v2147
        %v2154 = vmax.f32 %v2150, 0.0
        %v2155 = vmax.f32 %v2151, 0.0
        %v2156 = vmax.f32 %v2152, 0.0
        %v2157 = vmax.f32 %v2153, 0.0
        %2158 = vst [vmem:[%s362] sm:$0xff] %v2154
        %2159 = vst [vmem:[%s362 + $0x8] sm:$0xff] %v2155
        %2160 = vst [vmem:[%s362 + $0x10] sm:$0xff] %v2156
        %2161 = vst [vmem:[%s362 + $0x18] sm:$0xff] %v2157
        %s2162 = sand.u32 %s186, 1
        %s2163 = scalar_lea.sflag [#allocation4], %s2162
        %s2164 = sand.u32 %s186, 1
        %s2165 = smul.addr %s2164, 32
        %s2166 = scalar_lea.vmem [#allocation11], %s2165
        // Predicated region
        $region69: #{tpu_custom_call.1} parent=47 // pred_check
          %p2167 = pneg %p196
        $region70: #{tpu_custom_call.1} parent=47 // pred_check_branch
          %2169 = sbr.rel (%p2167) target = $region72
        $region71: #{tpu_custom_call.1} parent=47 // pred_region
          %s2170 = smul.u32 2, %s26
          %2172 = vsyncadd %s2163, 0
          %s2173 = smul.addr %s2170, 2
          %s2174 = smul.addr %s2173, 8
          %s2175 = scalar_lea.hbm %s7, %s2174
          %s2176 = sshll.u32 %s2166, 4
          %s2177 = int_to_ptr.vmem [resolvable:$true] %s2176
          %s2178 = sshll.u32 %s2175, 4
          %s2179 = int_to_ptr.hbm [resolvable:$true] %s2178
          %2184 = dma.vmem_to_hbm [thread:$0]  %s2177, 512, %s2179, %s2163, 256, 256, 16
        $region72: #{tpu_custom_call.1} parent=47 // pred_fallthru
          _
      $region48: #{tpu_custom_call.1} parent=5 // pred_fallthru
        _
      %p2185 = scmp.le.s32.totalorder 2, %s21
      // Predicated region
      $region73: #{tpu_custom_call.1} parent=5 // pred_check
        %p2186 = pneg %p2185
      $region74: #{tpu_custom_call.1} parent=5 // pred_check_branch
        %2188 = sbr.rel (%p2186) target = $region76
      $region75: #{tpu_custom_call.1} parent=5 // pred_region
        %s2189 = ssub.s32 %s21, 2
        // Predicated region
        $region77: #{tpu_custom_call.1} parent=75 // pred_check
          %p2190 = pneg %p202
        $region78: #{tpu_custom_call.1} parent=75 // pred_check_branch
          %2192 = sbr.rel (%p2190) target = $region80
        $region79: #{tpu_custom_call.1} parent=75 // pred_region
          %s2193 = sand.u32 %s187, 1
          %s2194 = scalar_lea.sflag [#allocation4], %s2193
          %s2195 = sand.u32 %s187, 1
          %s2196 = smul.addr %s2195, 32
          %s2197 = scalar_lea.vmem [#allocation11], %s2196
          %2199 = dma.done %s2194, 512
        $region80: #{tpu_custom_call.1} parent=75 // pred_fallthru
          _
      $region76: #{tpu_custom_call.1} parent=5 // pred_fallthru
        _
    $region6: #{tpu_custom_call.1} parent=1 // loop_footer
      %s25 = sadd.s32 1, %s21
    $region7: #{tpu_custom_call.1} parent=1 // loop_footer_branch
      %20 = sbr.rel target = $region3
    $region8: #{tpu_custom_call.1} parent=1 // loop_exit
      _
    %2200 = vsyncpa [#allocation3], 1
    %s2201 = scalar_lea.sflag [#allocation3], 1
    %2202 = vsyncpa %s2201, 1
    %2203 = vsyncpa [#allocation6], 1
    %2204 = vsyncpa [#allocation9], 1
    %2205 = vsyncpa [#allocation4], 1
    %s2206 = scalar_lea.sflag [#allocation4], 1
    %2207 = vsyncpa %s2206, 1

</llo_original>
